<compile_context>
chip_gen: v5e
topology: v5e:2x2
jax: 0.10.0
libtpu: 0.0.40
codegen_flags: <defaults>
</compile_context>

<pallas_src>
import functools

import jax
import jax.numpy as jnp
from jax.experimental import pallas as pl
from jax.experimental.pallas import tpu as pltpu


_TAPS = tuple((dy, dx) for dy in (-1, 0, 1) for dx in (-1, 0, 1))   # row-major 3x3


def _hardswish(v):
    return v * jnp.clip(v + 3.0, 0.0, 6.0) * (1.0 / 6.0)


def _leaky_relu(v):
    return jnp.maximum(v, 0.1 * v)


def _csp_kernel(x_ref, mask_ref, wcv1_ref, bcv1_ref, wm1_ref, bm1_ref,
                wm2_ref, bm2_ref, wcv3_ref, wcv2_ref, bcspa_ref, bcspb_ref,
                wcv4a_ref, wcv4b_ref, bcv4_ref, out_ref, *, W):
    f32 = jnp.float32
    x = x_ref[0]                                   # (c1, P): pixels on lanes
    P = x.shape[1]
    dot = lambda a, b: jnp.dot(a, b, preferred_element_type=f32)

    # (1, P) border masks for the 8 off-centre taps (loaded once, hoisted).
    tap_masks = [mask_ref[k] for k in range(8)]

    # cv1: 1x1 conv + folded BN + Hardswish
    h = _hardswish(dot(wcv1_ref[...], x) + bcv1_ref[...])          # (c_, P)

    n = wm1_ref.shape[0]

    def bottleneck(i, h):
        # Bottleneck.cv1 : 1x1 conv + BN + Hardswish
        t = _hardswish(dot(wm1_ref[i], h) + bm1_ref[i])            # (c_, P)
        # Bottleneck.cv2 : 3x3 SAME conv as ONE fused matmul over 9 lane-rolled taps.
        taps = []
        mi = 0
        for dy, dx in _TAPS:
            if dy == 0 and dx == 0:
                taps.append(t)
            else:
                s = dy * W + dx                     # flat pixel offset of this tap
                sh = pltpu.roll(t, (-s) % P, axis=1)
                taps.append(sh * tap_masks[mi])     # kill wrap-around at borders
                mi += 1
        taps = jnp.concatenate(taps, axis=0)                       # (9*c_, P)
        t = _hardswish(dot(wm2_ref[i], taps) + bm2_ref[i])         # (c_, P)
        return h + t                                               # shortcut

    h = jax.lax.fori_loop(0, n, bottleneck, h, unroll=True)

    # cv3 / cv2 (plain convs, post-concat BN scale folded into rows), LeakyReLU(0.1)
    z1 = _leaky_relu(dot(wcv3_ref[...], h) + bcspa_ref[...])       # (c_, P)
    z2 = _leaky_relu(dot(wcv2_ref[...], x) + bcspb_ref[...])       # (c_, P)
    # cv4 over concatenated channels == split matmul (no in-kernel concat)
    o = dot(wcv4a_ref[...], z1) + dot(wcv4b_ref[...], z2)
    o = _hardswish(o + bcv4_ref[...])                              # (c2, P)
    out_ref[0] = o.astype(out_ref.dtype)                           # lane-dense store


def _fold_bn(gamma, beta, mean, var, eps=1e-5):
    scale = gamma / jnp.sqrt(var + eps)
    return scale, beta - mean * scale


def bottleneck_csp(x_nchw, params):
    """x_nchw: (B, c1, H, W) float32. Returns (B, c2, H, W) float32."""
    B, c1, H, W = x_nchw.shape
    P = H * W

    w_cv1 = params['w_cv1']                # (c_, c1, 1, 1)
    c_ = w_cv1.shape[0]
    w_cv4 = params['w_cv4']                # (c2, 2c_, 1, 1)
    c2 = w_cv4.shape[0]
    n = len(params['w_m1'])

    # ---- wrapper-side (free) weight preprocessing: BN folding + tap fusion ----
    def w1x1(w):                           # (co, ci, 1, 1) -> (co, ci)
        return w[:, :, 0, 0]

    def w3x3_fused(w):                     # (co, ci, 3, 3) -> (co, 9*ci), taps row-major
        return jnp.transpose(w, (0, 2, 3, 1)).reshape(w.shape[0], 9 * w.shape[1])

    def conv_bn(w2d, bn):                  # fold eval-mode BN into weight rows + bias col
        s, b = _fold_bn(*bn)
        return w2d * s[:, None], b[:, None]

    wk_cv1, bk_cv1 = conv_bn(w1x1(w_cv1), params['bn_cv1'])
    m1 = [conv_bn(w1x1(w), bn) for w, bn in zip(params['w_m1'], params['bn_m1'])]
    wk_m1 = jnp.stack([w for w, _ in m1])                           # (n, c_, c_)
    bk_m1 = jnp.stack([b for _, b in m1])                           # (n, c_, 1)
    m2 = [conv_bn(w3x3_fused(w), bn) for w, bn in zip(params['w_m2'], params['bn_m2'])]
    wk_m2 = jnp.stack([w for w, _ in m2])                           # (n, c_, 9*c_)
    bk_m2 = jnp.stack([b for _, b in m2])                           # (n, c_, 1)

    # post-concat BN folded per half into the plain cv3 / cv2 convolutions
    s_csp, b_csp = _fold_bn(*params['bn_csp'])                      # (2c_,)
    wk_cv3 = w1x1(params['w_cv3']) * s_csp[:c_, None]
    wk_cv2 = w1x1(params['w_cv2']) * s_csp[c_:, None]
    bk_cspa = b_csp[:c_, None]
    bk_cspb = b_csp[c_:, None]

    wk_cv4, bk_cv4 = conv_bn(w1x1(w_cv4), params['bn_cv4'])         # (c2, 2c_), (c2, 1)
    wk_cv4a, wk_cv4b = wk_cv4[:, :c_], wk_cv4[:, c_:]

    # (8, 1, P) border masks for the off-centre 3x3 taps (tiny; lane vectors).
    pidx = jnp.arange(P, dtype=jnp.int32)
    prow, pcol = pidx // W, pidx % W
    masks = []
    for dy, dx in _TAPS:
        if dy == 0 and dx == 0:
            continue
        ok = ((prow + dy >= 0) & (prow + dy <= H - 1) &
              (pcol + dx >= 0) & (pcol + dx <= W - 1))
        masks.append(ok.astype(jnp.float32).reshape(1, P))
    tap_masks = jnp.stack(masks)                                    # (8, 1, P)

    # NCHW flattens directly to (B, C, H*W): channels on sublanes, pixels on lanes.
    x_flat = x_nchw.reshape(B, c1, P)

    kernel = functools.partial(_csp_kernel, W=W)
    rep2 = lambda b: (0, 0)
    rep3 = lambda b: (0, 0, 0)

    out_flat = pl.pallas_call(
        kernel,
        out_shape=jax.ShapeDtypeStruct((B, c2, P), jnp.float32),
        grid_spec=pltpu.PrefetchScalarGridSpec(
            num_scalar_prefetch=0,
            grid=(B,),
            in_specs=[
                pl.BlockSpec((1, c1, P), lambda b: (b, 0, 0)),   # x (per image)
                pl.BlockSpec((8, 1, P), rep3),                   # 3x3 border masks
                pl.BlockSpec((c_, c1), rep2),                    # cv1 weight (BN folded)
                pl.BlockSpec((c_, 1), rep2),                     # cv1 bias
                pl.BlockSpec((n, c_, c_), rep3),                 # m[i].cv1 weights
                pl.BlockSpec((n, c_, 1), rep3),                  # m[i].cv1 biases
                pl.BlockSpec((n, c_, 9 * c_), rep3),             # m[i].cv2 fused 3x3 weights
                pl.BlockSpec((n, c_, 1), rep3),                  # m[i].cv2 biases
                pl.BlockSpec((c_, c_), rep2),                    # cv3 (csp-BN scale folded)
                pl.BlockSpec((c_, c1), rep2),                    # cv2 (csp-BN scale folded)
                pl.BlockSpec((c_, 1), rep2),                     # csp bias (y1 half)
                pl.BlockSpec((c_, 1), rep2),                     # csp bias (y2 half)
                pl.BlockSpec((c2, c_), rep2),                    # cv4 weight (y1 half)
                pl.BlockSpec((c2, c_), rep2),                    # cv4 weight (y2 half)
                pl.BlockSpec((c2, 1), rep2),                     # cv4 bias
            ],
            out_specs=pl.BlockSpec((1, c2, P), lambda b: (b, 0, 0)),
        ),
        compiler_params=pltpu.CompilerParams(
            dimension_semantics=("parallel",),
            vmem_limit_bytes=32 * 1024 * 1024),
    )(x_flat, tap_masks, wk_cv1, bk_cv1, wk_m1, bk_m1, wk_m2, bk_m2,
      wk_cv3, wk_cv2, bk_cspa, bk_cspb, wk_cv4a, wk_cv4b, bk_cv4)

    return out_flat.reshape(B, c2, H, W)


def _reference(x_nchw, params):
    x = jnp.transpose(x_nchw, (0, 2, 3, 1))          # NHWC
    hp = jax.lax.Precision.HIGHEST

    def conv1x1(v, w):
        return jnp.einsum('bhwc,oc->bhwo', v, w[:, :, 0, 0], precision=hp)

    def conv3x3(v, w):
        return jax.lax.conv_general_dilated(
            v, jnp.transpose(w, (2, 3, 1, 0)), (1, 1), 'SAME',
            dimension_numbers=('NHWC', 'HWIO', 'NHWC'), precision=hp)

    def bn(v, g, b, m, var):
        return (v - m) / jnp.sqrt(var + 1e-5) * g + b

    def hsw(v):
        return v * jnp.clip(v + 3.0, 0.0, 6.0) / 6.0

    def lrelu(v):
        return jnp.where(v >= 0, v, 0.1 * v)

    h = hsw(bn(conv1x1(x, params['w_cv1']), *params['bn_cv1']))
    for i in range(len(params['w_m1'])):
        t = hsw(bn(conv1x1(h, params['w_m1'][i]), *params['bn_m1'][i]))
        t = hsw(bn(conv3x3(t, params['w_m2'][i]), *params['bn_m2'][i]))
        h = h + t
    y1 = conv1x1(h, params['w_cv3'])
    y2 = conv1x1(x, params['w_cv2'])
    cat = jnp.concatenate([y1, y2], axis=-1)
    z = lrelu(bn(cat, *params['bn_csp']))
    out = hsw(bn(conv1x1(z, params['w_cv4']), *params['bn_cv4']))
    return jnp.transpose(out, (0, 3, 1, 2))


if __name__ == "__main__":
    # Small shapes consistent with the module: BottleneckCSP(c1=8, c2=16, n=2).
    B, c1, c2, H, W = 2, 8, 16, 16, 16
    n = 2
    e = 0.5
    c_ = int(c2 * e)                                  # 8

    key = jax.random.PRNGKey(0)
    keys = list(jax.random.split(key, 10 + 4 * n))
    ki = iter(keys)

    def conv_w(k, co, ci, kh, kw):
        return jax.random.normal(k, (co, ci, kh, kw), jnp.float32) / float((ci * kh * kw) ** 0.5)

    def bn_p(k, c):
        k1, k2, k3, k4 = jax.random.split(k, 4)
        gamma = 1.0 + 0.2 * jax.random.normal(k1, (c,), jnp.float32)
        beta = 0.1 * jax.random.normal(k2, (c,), jnp.float32)
        mean = 0.1 * jax.random.normal(k3, (c,), jnp.float32)
        var = jax.random.uniform(k4, (c,), jnp.float32, minval=0.5, maxval=1.5)
        return gamma, beta, mean, var

    params = {
        'w_cv1': conv_w(next(ki), c_, c1, 1, 1),
        'bn_cv1': bn_p(next(ki), c_),
        'w_m1': [conv_w(next(ki), c_, c_, 1, 1) for _ in range(n)],
        'bn_m1': [bn_p(next(ki), c_) for _ in range(n)],
        'w_m2': [conv_w(next(ki), c_, c_, 3, 3) for _ in range(n)],
        'bn_m2': [bn_p(next(ki), c_) for _ in range(n)],
        'w_cv3': conv_w(next(ki), c_, c_, 1, 1),
        'w_cv2': conv_w(next(ki), c_, c1, 1, 1),
        'bn_csp': bn_p(next(ki), 2 * c_),
        'w_cv4': conv_w(next(ki), c2, 2 * c_, 1, 1),
        'bn_cv4': bn_p(next(ki), c2),
    }
    x = jax.random.normal(next(ki), (B, c1, H, W), jnp.float32)

    out = bottleneck_csp(x, params)
    out = jax.block_until_ready(out)

    ref = _reference(x, params)
    assert out.shape == (B, c2, H, W)
    assert jnp.allclose(out, ref, atol=2e-3, rtol=2e-3), float(jnp.max(jnp.abs(out - ref)))

    print("KERNEL_OK")
</pallas_src>

<mosaic_0001>
module attributes {stable_mosaic.version = 11 : i64} {
  func.func @_csp_kernel(%arg0: i32, %arg1: memref<1x8x256xf32, #tpu.memory_space<vmem>>, %arg2: memref<8x1x256xf32, #tpu.memory_space<vmem>>, %arg3: memref<8x8xf32, #tpu.memory_space<vmem>>, %arg4: memref<8x1xf32, #tpu.memory_space<vmem>>, %arg5: memref<2x8x8xf32, #tpu.memory_space<vmem>>, %arg6: memref<2x8x1xf32, #tpu.memory_space<vmem>>, %arg7: memref<2x8x72xf32, #tpu.memory_space<vmem>>, %arg8: memref<2x8x1xf32, #tpu.memory_space<vmem>>, %arg9: memref<8x8xf32, #tpu.memory_space<vmem>>, %arg10: memref<8x8xf32, #tpu.memory_space<vmem>>, %arg11: memref<8x1xf32, #tpu.memory_space<vmem>>, %arg12: memref<8x1xf32, #tpu.memory_space<vmem>>, %arg13: memref<16x8xf32, #tpu.memory_space<vmem>>, %arg14: memref<16x8xf32, #tpu.memory_space<vmem>>, %arg15: memref<16x1xf32, #tpu.memory_space<vmem>>, %arg16: memref<1x16x256xf32, #tpu.memory_space<vmem>>) attributes {dimension_semantics = [#tpu.dimension_semantics<parallel>], iteration_bounds = array<i64: 2>, scalar_prefetch = 0 : i64, scratch_operands = 0 : i64, tpu.core_type = #tpu.core_type<tc>, window_params = [{transform_indices = @transform_0, window_bounds = array<i64: 1, 8, 256>}, {pipeline_mode = #tpu.pipeline_mode<synchronous>, transform_indices = @transform_1, window_bounds = array<i64: 8, 1, 256>}, {pipeline_mode = #tpu.pipeline_mode<synchronous>, transform_indices = @transform_2, window_bounds = array<i64: 8, 8>}, {pipeline_mode = #tpu.pipeline_mode<synchronous>, transform_indices = @transform_3, window_bounds = array<i64: 8, 1>}, {pipeline_mode = #tpu.pipeline_mode<synchronous>, transform_indices = @transform_4, window_bounds = array<i64: 2, 8, 8>}, {pipeline_mode = #tpu.pipeline_mode<synchronous>, transform_indices = @transform_5, window_bounds = array<i64: 2, 8, 1>}, {pipeline_mode = #tpu.pipeline_mode<synchronous>, transform_indices = @transform_6, window_bounds = array<i64: 2, 8, 72>}, {pipeline_mode = #tpu.pipeline_mode<synchronous>, transform_indices = @transform_7, window_bounds = array<i64: 2, 8, 1>}, {pipeline_mode = #tpu.pipeline_mode<synchronous>, transform_indices = @transform_8, window_bounds = array<i64: 8, 8>}, {pipeline_mode = #tpu.pipeline_mode<synchronous>, transform_indices = @transform_9, window_bounds = array<i64: 8, 8>}, {pipeline_mode = #tpu.pipeline_mode<synchronous>, transform_indices = @transform_10, window_bounds = array<i64: 8, 1>}, {pipeline_mode = #tpu.pipeline_mode<synchronous>, transform_indices = @transform_11, window_bounds = array<i64: 8, 1>}, {pipeline_mode = #tpu.pipeline_mode<synchronous>, transform_indices = @transform_12, window_bounds = array<i64: 16, 8>}, {pipeline_mode = #tpu.pipeline_mode<synchronous>, transform_indices = @transform_13, window_bounds = array<i64: 16, 8>}, {pipeline_mode = #tpu.pipeline_mode<synchronous>, transform_indices = @transform_14, window_bounds = array<i64: 16, 1>}, {transform_indices = @transform_15, window_bounds = array<i64: 1, 16, 256>}]} {
    %c0 = arith.constant 0 : index
    %c0_0 = arith.constant 0 : index
    %c0_1 = arith.constant 0 : index
    %0 = vector.load %arg1[%c0, %c0_0, %c0_1] : memref<1x8x256xf32, #tpu.memory_space<vmem>>, vector<1x8x256xf32>
    %1 = vector.shape_cast %0 : vector<1x8x256xf32> to vector<8x256xf32>
    %c0_2 = arith.constant 0 : index
    %c0_3 = arith.constant 0 : index
    %c0_4 = arith.constant 0 : index
    %2 = vector.load %arg2[%c0_2, %c0_3, %c0_4] : memref<8x1x256xf32, #tpu.memory_space<vmem>>, vector<1x1x256xf32>
    %3 = vector.shape_cast %2 : vector<1x1x256xf32> to vector<1x256xf32>
    %c1 = arith.constant 1 : index
    %c0_5 = arith.constant 0 : index
    %c0_6 = arith.constant 0 : index
    %4 = vector.load %arg2[%c1, %c0_5, %c0_6] : memref<8x1x256xf32, #tpu.memory_space<vmem>>, vector<1x1x256xf32>
    %5 = vector.shape_cast %4 : vector<1x1x256xf32> to vector<1x256xf32>
    %c2 = arith.constant 2 : index
    %c0_7 = arith.constant 0 : index
    %c0_8 = arith.constant 0 : index
    %6 = vector.load %arg2[%c2, %c0_7, %c0_8] : memref<8x1x256xf32, #tpu.memory_space<vmem>>, vector<1x1x256xf32>
    %7 = vector.shape_cast %6 : vector<1x1x256xf32> to vector<1x256xf32>
    %c3 = arith.constant 3 : index
    %c0_9 = arith.constant 0 : index
    %c0_10 = arith.constant 0 : index
    %8 = vector.load %arg2[%c3, %c0_9, %c0_10] : memref<8x1x256xf32, #tpu.memory_space<vmem>>, vector<1x1x256xf32>
    %9 = vector.shape_cast %8 : vector<1x1x256xf32> to vector<1x256xf32>
    %c4 = arith.constant 4 : index
    %c0_11 = arith.constant 0 : index
    %c0_12 = arith.constant 0 : index
    %10 = vector.load %arg2[%c4, %c0_11, %c0_12] : memref<8x1x256xf32, #tpu.memory_space<vmem>>, vector<1x1x256xf32>
    %11 = vector.shape_cast %10 : vector<1x1x256xf32> to vector<1x256xf32>
    %c5 = arith.constant 5 : index
    %c0_13 = arith.constant 0 : index
    %c0_14 = arith.constant 0 : index
    %12 = vector.load %arg2[%c5, %c0_13, %c0_14] : memref<8x1x256xf32, #tpu.memory_space<vmem>>, vector<1x1x256xf32>
    %13 = vector.shape_cast %12 : vector<1x1x256xf32> to vector<1x256xf32>
    %c6 = arith.constant 6 : index
    %c0_15 = arith.constant 0 : index
    %c0_16 = arith.constant 0 : index
    %14 = vector.load %arg2[%c6, %c0_15, %c0_16] : memref<8x1x256xf32, #tpu.memory_space<vmem>>, vector<1x1x256xf32>
    %15 = vector.shape_cast %14 : vector<1x1x256xf32> to vector<1x256xf32>
    %c7 = arith.constant 7 : index
    %c0_17 = arith.constant 0 : index
    %c0_18 = arith.constant 0 : index
    %16 = vector.load %arg2[%c7, %c0_17, %c0_18] : memref<8x1x256xf32, #tpu.memory_space<vmem>>, vector<1x1x256xf32>
    %17 = vector.shape_cast %16 : vector<1x1x256xf32> to vector<1x256xf32>
    %c0_19 = arith.constant 0 : index
    %c0_20 = arith.constant 0 : index
    %18 = vector.load %arg3[%c0_19, %c0_20] : memref<8x8xf32, #tpu.memory_space<vmem>>, vector<8x8xf32>
    %cst = arith.constant dense<0.000000e+00> : vector<8x256xf32>
    %19 = tpu.matmul %18, %1, %cst {dimension_numbers = #tpu.dot_dimension_numbers<[1], [0], [0], [1], [0, 0, 1, 1], [], []>} : vector<8x8xf32>, vector<8x256xf32>, vector<8x256xf32> -> vector<8x256xf32>
    %c0_21 = arith.constant 0 : index
    %c0_22 = arith.constant 0 : index
    %20 = vector.load %arg4[%c0_21, %c0_22] : memref<8x1xf32, #tpu.memory_space<vmem>>, vector<8x1xf32>
    %21 = vector.broadcast %20 : vector<8x1xf32> to vector<8x256xf32>
    %22 = arith.addf %19, %21 : vector<8x256xf32>
    %cst_23 = arith.constant 3.000000e+00 : f32
    %23 = vector.broadcast %cst_23 : f32 to vector<8x256xf32>
    %24 = arith.addf %22, %23 : vector<8x256xf32>
    %cst_24 = arith.constant 0.000000e+00 : f32
    %cst_25 = arith.constant 6.000000e+00 : f32
    %25 = vector.broadcast %cst_24 : f32 to vector<8x256xf32>
    %26 = arith.maximumf %25, %24 : vector<8x256xf32>
    %27 = vector.broadcast %cst_25 : f32 to vector<8x256xf32>
    %28 = arith.minimumf %27, %26 : vector<8x256xf32>
    %29 = arith.mulf %22, %28 : vector<8x256xf32>
    %cst_26 = arith.constant 0.166666672 : f32
    %30 = vector.broadcast %cst_26 : f32 to vector<8x256xf32>
    %31 = arith.mulf %29, %30 : vector<8x256xf32>
    %c0_i32 = arith.constant 0 : i32
    %32 = arith.index_cast %c0_i32 : i32 to index
    %c0_27 = arith.constant 0 : index
    %c0_28 = arith.constant 0 : index
    %33 = vector.load %arg5[%32, %c0_27, %c0_28] : memref<2x8x8xf32, #tpu.memory_space<vmem>>, vector<1x8x8xf32>
    %34 = vector.shape_cast %33 : vector<1x8x8xf32> to vector<8x8xf32>
    %cst_29 = arith.constant dense<0.000000e+00> : vector<8x256xf32>
    %35 = tpu.matmul %34, %31, %cst_29 {dimension_numbers = #tpu.dot_dimension_numbers<[1], [0], [0], [1], [0, 0, 1, 1], [], []>} : vector<8x8xf32>, vector<8x256xf32>, vector<8x256xf32> -> vector<8x256xf32>
    %36 = arith.index_cast %c0_i32 : i32 to index
    %c0_30 = arith.constant 0 : index
    %c0_31 = arith.constant 0 : index
    %37 = vector.load %arg6[%36, %c0_30, %c0_31] : memref<2x8x1xf32, #tpu.memory_space<vmem>>, vector<1x8x1xf32>
    %38 = vector.shape_cast %37 : vector<1x8x1xf32> to vector<8x1xf32>
    %39 = vector.broadcast %38 : vector<8x1xf32> to vector<8x256xf32>
    %40 = arith.addf %35, %39 : vector<8x256xf32>
    %cst_32 = arith.constant 3.000000e+00 : f32
    %41 = vector.broadcast %cst_32 : f32 to vector<8x256xf32>
    %42 = arith.addf %40, %41 : vector<8x256xf32>
    %cst_33 = arith.constant 0.000000e+00 : f32
    %cst_34 = arith.constant 6.000000e+00 : f32
    %43 = vector.broadcast %cst_33 : f32 to vector<8x256xf32>
    %44 = arith.maximumf %43, %42 : vector<8x256xf32>
    %45 = vector.broadcast %cst_34 : f32 to vector<8x256xf32>
    %46 = arith.minimumf %45, %44 : vector<8x256xf32>
    %47 = arith.mulf %40, %46 : vector<8x256xf32>
    %cst_35 = arith.constant 0.166666672 : f32
    %48 = vector.broadcast %cst_35 : f32 to vector<8x256xf32>
    %49 = arith.mulf %47, %48 : vector<8x256xf32>
    %c17_i32 = arith.constant 17 : i32
    %50 = tpu.dynamic_rotate %49 by %c17_i32 dim 1 : vector<8x256xf32>, i32 -> vector<8x256xf32>
    %51 = vector.broadcast %3 : vector<1x256xf32> to vector<8x256xf32>
    %52 = arith.mulf %50, %51 : vector<8x256xf32>
    %c16_i32 = arith.constant 16 : i32
    %53 = tpu.dynamic_rotate %49 by %c16_i32 dim 1 : vector<8x256xf32>, i32 -> vector<8x256xf32>
    %54 = vector.broadcast %5 : vector<1x256xf32> to vector<8x256xf32>
    %55 = arith.mulf %53, %54 : vector<8x256xf32>
    %c15_i32 = arith.constant 15 : i32
    %56 = tpu.dynamic_rotate %49 by %c15_i32 dim 1 : vector<8x256xf32>, i32 -> vector<8x256xf32>
    %57 = vector.broadcast %7 : vector<1x256xf32> to vector<8x256xf32>
    %58 = arith.mulf %56, %57 : vector<8x256xf32>
    %c1_i32 = arith.constant 1 : i32
    %59 = tpu.dynamic_rotate %49 by %c1_i32 dim 1 : vector<8x256xf32>, i32 -> vector<8x256xf32>
    %60 = vector.broadcast %9 : vector<1x256xf32> to vector<8x256xf32>
    %61 = arith.mulf %59, %60 : vector<8x256xf32>
    %c255_i32 = arith.constant 255 : i32
    %62 = tpu.dynamic_rotate %49 by %c255_i32 dim 1 : vector<8x256xf32>, i32 -> vector<8x256xf32>
    %63 = vector.broadcast %11 : vector<1x256xf32> to vector<8x256xf32>
    %64 = arith.mulf %62, %63 : vector<8x256xf32>
    %c241_i32 = arith.constant 241 : i32
    %65 = tpu.dynamic_rotate %49 by %c241_i32 dim 1 : vector<8x256xf32>, i32 -> vector<8x256xf32>
    %66 = vector.broadcast %13 : vector<1x256xf32> to vector<8x256xf32>
    %67 = arith.mulf %65, %66 : vector<8x256xf32>
    %c240_i32 = arith.constant 240 : i32
    %68 = tpu.dynamic_rotate %49 by %c240_i32 dim 1 : vector<8x256xf32>, i32 -> vector<8x256xf32>
    %69 = vector.broadcast %15 : vector<1x256xf32> to vector<8x256xf32>
    %70 = arith.mulf %68, %69 : vector<8x256xf32>
    %c239_i32 = arith.constant 239 : i32
    %71 = tpu.dynamic_rotate %49 by %c239_i32 dim 1 : vector<8x256xf32>, i32 -> vector<8x256xf32>
    %72 = vector.broadcast %17 : vector<1x256xf32> to vector<8x256xf32>
    %73 = arith.mulf %71, %72 : vector<8x256xf32>
    %74 = tpu.concatenate %52, %55, %58, %61, %49, %64, %67, %70, %73 in 0 : vector<8x256xf32>, vector<8x256xf32>, vector<8x256xf32>, vector<8x256xf32>, vector<8x256xf32>, vector<8x256xf32>, vector<8x256xf32>, vector<8x256xf32>, vector<8x256xf32> -> vector<72x256xf32>
    %75 = arith.index_cast %c0_i32 : i32 to index
    %c0_36 = arith.constant 0 : index
    %c0_37 = arith.constant 0 : index
    %76 = vector.load %arg7[%75, %c0_36, %c0_37] : memref<2x8x72xf32, #tpu.memory_space<vmem>>, vector<1x8x72xf32>
    %77 = vector.shape_cast %76 : vector<1x8x72xf32> to vector<8x72xf32>
    %cst_38 = arith.constant dense<0.000000e+00> : vector<8x256xf32>
    %78 = tpu.matmul %77, %74, %cst_38 {dimension_numbers = #tpu.dot_dimension_numbers<[1], [0], [0], [1], [0, 0, 1, 1], [], []>} : vector<8x72xf32>, vector<72x256xf32>, vector<8x256xf32> -> vector<8x256xf32>
    %79 = arith.index_cast %c0_i32 : i32 to index
    %c0_39 = arith.constant 0 : index
    %c0_40 = arith.constant 0 : index
    %80 = vector.load %arg8[%79, %c0_39, %c0_40] : memref<2x8x1xf32, #tpu.memory_space<vmem>>, vector<1x8x1xf32>
    %81 = vector.shape_cast %80 : vector<1x8x1xf32> to vector<8x1xf32>
    %82 = vector.broadcast %81 : vector<8x1xf32> to vector<8x256xf32>
    %83 = arith.addf %78, %82 : vector<8x256xf32>
    %cst_41 = arith.constant 3.000000e+00 : f32
    %84 = vector.broadcast %cst_41 : f32 to vector<8x256xf32>
    %85 = arith.addf %83, %84 : vector<8x256xf32>
    %cst_42 = arith.constant 0.000000e+00 : f32
    %cst_43 = arith.constant 6.000000e+00 : f32
    %86 = vector.broadcast %cst_42 : f32 to vector<8x256xf32>
    %87 = arith.maximumf %86, %85 : vector<8x256xf32>
    %88 = vector.broadcast %cst_43 : f32 to vector<8x256xf32>
    %89 = arith.minimumf %88, %87 : vector<8x256xf32>
    %90 = arith.mulf %83, %89 : vector<8x256xf32>
    %cst_44 = arith.constant 0.166666672 : f32
    %91 = vector.broadcast %cst_44 : f32 to vector<8x256xf32>
    %92 = arith.mulf %90, %91 : vector<8x256xf32>
    %93 = arith.addf %31, %92 : vector<8x256xf32>
    %c1_i32_45 = arith.constant 1 : i32
    %94 = arith.index_cast %c1_i32_45 : i32 to index
    %c0_46 = arith.constant 0 : index
    %c0_47 = arith.constant 0 : index
    %95 = vector.load %arg5[%94, %c0_46, %c0_47] : memref<2x8x8xf32, #tpu.memory_space<vmem>>, vector<1x8x8xf32>
    %96 = vector.shape_cast %95 : vector<1x8x8xf32> to vector<8x8xf32>
    %cst_48 = arith.constant dense<0.000000e+00> : vector<8x256xf32>
    %97 = tpu.matmul %96, %93, %cst_48 {dimension_numbers = #tpu.dot_dimension_numbers<[1], [0], [0], [1], [0, 0, 1, 1], [], []>} : vector<8x8xf32>, vector<8x256xf32>, vector<8x256xf32> -> vector<8x256xf32>
    %98 = arith.index_cast %c1_i32_45 : i32 to index
    %c0_49 = arith.constant 0 : index
    %c0_50 = arith.constant 0 : index
    %99 = vector.load %arg6[%98, %c0_49, %c0_50] : memref<2x8x1xf32, #tpu.memory_space<vmem>>, vector<1x8x1xf32>
    %100 = vector.shape_cast %99 : vector<1x8x1xf32> to vector<8x1xf32>
    %101 = vector.broadcast %100 : vector<8x1xf32> to vector<8x256xf32>
    %102 = arith.addf %97, %101 : vector<8x256xf32>
    %cst_51 = arith.constant 3.000000e+00 : f32
    %103 = vector.broadcast %cst_51 : f32 to vector<8x256xf32>
    %104 = arith.addf %102, %103 : vector<8x256xf32>
    %cst_52 = arith.constant 0.000000e+00 : f32
    %cst_53 = arith.constant 6.000000e+00 : f32
    %105 = vector.broadcast %cst_52 : f32 to vector<8x256xf32>
    %106 = arith.maximumf %105, %104 : vector<8x256xf32>
    %107 = vector.broadcast %cst_53 : f32 to vector<8x256xf32>
    %108 = arith.minimumf %107, %106 : vector<8x256xf32>
    %109 = arith.mulf %102, %108 : vector<8x256xf32>
    %cst_54 = arith.constant 0.166666672 : f32
    %110 = vector.broadcast %cst_54 : f32 to vector<8x256xf32>
    %111 = arith.mulf %109, %110 : vector<8x256xf32>
    %c17_i32_55 = arith.constant 17 : i32
    %112 = tpu.dynamic_rotate %111 by %c17_i32_55 dim 1 : vector<8x256xf32>, i32 -> vector<8x256xf32>
    %113 = vector.broadcast %3 : vector<1x256xf32> to vector<8x256xf32>
    %114 = arith.mulf %112, %113 : vector<8x256xf32>
    %c16_i32_56 = arith.constant 16 : i32
    %115 = tpu.dynamic_rotate %111 by %c16_i32_56 dim 1 : vector<8x256xf32>, i32 -> vector<8x256xf32>
    %116 = vector.broadcast %5 : vector<1x256xf32> to vector<8x256xf32>
    %117 = arith.mulf %115, %116 : vector<8x256xf32>
    %c15_i32_57 = arith.constant 15 : i32
    %118 = tpu.dynamic_rotate %111 by %c15_i32_57 dim 1 : vector<8x256xf32>, i32 -> vector<8x256xf32>
    %119 = vector.broadcast %7 : vector<1x256xf32> to vector<8x256xf32>
    %120 = arith.mulf %118, %119 : vector<8x256xf32>
    %c1_i32_58 = arith.constant 1 : i32
    %121 = tpu.dynamic_rotate %111 by %c1_i32_58 dim 1 : vector<8x256xf32>, i32 -> vector<8x256xf32>
    %122 = vector.broadcast %9 : vector<1x256xf32> to vector<8x256xf32>
    %123 = arith.mulf %121, %122 : vector<8x256xf32>
    %c255_i32_59 = arith.constant 255 : i32
    %124 = tpu.dynamic_rotate %111 by %c255_i32_59 dim 1 : vector<8x256xf32>, i32 -> vector<8x256xf32>
    %125 = vector.broadcast %11 : vector<1x256xf32> to vector<8x256xf32>
    %126 = arith.mulf %124, %125 : vector<8x256xf32>
    %c241_i32_60 = arith.constant 241 : i32
    %127 = tpu.dynamic_rotate %111 by %c241_i32_60 dim 1 : vector<8x256xf32>, i32 -> vector<8x256xf32>
    %128 = vector.broadcast %13 : vector<1x256xf32> to vector<8x256xf32>
    %129 = arith.mulf %127, %128 : vector<8x256xf32>
    %c240_i32_61 = arith.constant 240 : i32
    %130 = tpu.dynamic_rotate %111 by %c240_i32_61 dim 1 : vector<8x256xf32>, i32 -> vector<8x256xf32>
    %131 = vector.broadcast %15 : vector<1x256xf32> to vector<8x256xf32>
    %132 = arith.mulf %130, %131 : vector<8x256xf32>
    %c239_i32_62 = arith.constant 239 : i32
    %133 = tpu.dynamic_rotate %111 by %c239_i32_62 dim 1 : vector<8x256xf32>, i32 -> vector<8x256xf32>
    %134 = vector.broadcast %17 : vector<1x256xf32> to vector<8x256xf32>
    %135 = arith.mulf %133, %134 : vector<8x256xf32>
    %136 = tpu.concatenate %114, %117, %120, %123, %111, %126, %129, %132, %135 in 0 : vector<8x256xf32>, vector<8x256xf32>, vector<8x256xf32>, vector<8x256xf32>, vector<8x256xf32>, vector<8x256xf32>, vector<8x256xf32>, vector<8x256xf32>, vector<8x256xf32> -> vector<72x256xf32>
    %137 = arith.index_cast %c1_i32_45 : i32 to index
    %c0_63 = arith.constant 0 : index
    %c0_64 = arith.constant 0 : index
    %138 = vector.load %arg7[%137, %c0_63, %c0_64] : memref<2x8x72xf32, #tpu.memory_space<vmem>>, vector<1x8x72xf32>
    %139 = vector.shape_cast %138 : vector<1x8x72xf32> to vector<8x72xf32>
    %cst_65 = arith.constant dense<0.000000e+00> : vector<8x256xf32>
    %140 = tpu.matmul %139, %136, %cst_65 {dimension_numbers = #tpu.dot_dimension_numbers<[1], [0], [0], [1], [0, 0, 1, 1], [], []>} : vector<8x72xf32>, vector<72x256xf32>, vector<8x256xf32> -> vector<8x256xf32>
    %141 = arith.index_cast %c1_i32_45 : i32 to index
    %c0_66 = arith.constant 0 : index
    %c0_67 = arith.constant 0 : index
    %142 = vector.load %arg8[%141, %c0_66, %c0_67] : memref<2x8x1xf32, #tpu.memory_space<vmem>>, vector<1x8x1xf32>
    %143 = vector.shape_cast %142 : vector<1x8x1xf32> to vector<8x1xf32>
    %144 = vector.broadcast %143 : vector<8x1xf32> to vector<8x256xf32>
    %145 = arith.addf %140, %144 : vector<8x256xf32>
    %cst_68 = arith.constant 3.000000e+00 : f32
    %146 = vector.broadcast %cst_68 : f32 to vector<8x256xf32>
    %147 = arith.addf %145, %146 : vector<8x256xf32>
    %cst_69 = arith.constant 0.000000e+00 : f32
    %cst_70 = arith.constant 6.000000e+00 : f32
    %148 = vector.broadcast %cst_69 : f32 to vector<8x256xf32>
    %149 = arith.maximumf %148, %147 : vector<8x256xf32>
    %150 = vector.broadcast %cst_70 : f32 to vector<8x256xf32>
    %151 = arith.minimumf %150, %149 : vector<8x256xf32>
    %152 = arith.mulf %145, %151 : vector<8x256xf32>
    %cst_71 = arith.constant 0.166666672 : f32
    %153 = vector.broadcast %cst_71 : f32 to vector<8x256xf32>
    %154 = arith.mulf %152, %153 : vector<8x256xf32>
    %155 = arith.addf %93, %154 : vector<8x256xf32>
    %c2_i32 = arith.constant 2 : i32
    %c0_72 = arith.constant 0 : index
    %c0_73 = arith.constant 0 : index
    %156 = vector.load %arg9[%c0_72, %c0_73] : memref<8x8xf32, #tpu.memory_space<vmem>>, vector<8x8xf32>
    %cst_74 = arith.constant dense<0.000000e+00> : vector<8x256xf32>
    %157 = tpu.matmul %156, %155, %cst_74 {dimension_numbers = #tpu.dot_dimension_numbers<[1], [0], [0], [1], [0, 0, 1, 1], [], []>} : vector<8x8xf32>, vector<8x256xf32>, vector<8x256xf32> -> vector<8x256xf32>
    %c0_75 = arith.constant 0 : index
    %c0_76 = arith.constant 0 : index
    %158 = vector.load %arg11[%c0_75, %c0_76] : memref<8x1xf32, #tpu.memory_space<vmem>>, vector<8x1xf32>
    %159 = vector.broadcast %158 : vector<8x1xf32> to vector<8x256xf32>
    %160 = arith.addf %157, %159 : vector<8x256xf32>
    %cst_77 = arith.constant 1.000000e-01 : f32
    %161 = vector.broadcast %cst_77 : f32 to vector<8x256xf32>
    %162 = arith.mulf %161, %160 : vector<8x256xf32>
    %163 = arith.maximumf %160, %162 : vector<8x256xf32>
    %c0_78 = arith.constant 0 : index
    %c0_79 = arith.constant 0 : index
    %164 = vector.load %arg10[%c0_78, %c0_79] : memref<8x8xf32, #tpu.memory_space<vmem>>, vector<8x8xf32>
    %cst_80 = arith.constant dense<0.000000e+00> : vector<8x256xf32>
    %165 = tpu.matmul %164, %1, %cst_80 {dimension_numbers = #tpu.dot_dimension_numbers<[1], [0], [0], [1], [0, 0, 1, 1], [], []>} : vector<8x8xf32>, vector<8x256xf32>, vector<8x256xf32> -> vector<8x256xf32>
    %c0_81 = arith.constant 0 : index
    %c0_82 = arith.constant 0 : index
    %166 = vector.load %arg12[%c0_81, %c0_82] : memref<8x1xf32, #tpu.memory_space<vmem>>, vector<8x1xf32>
    %167 = vector.broadcast %166 : vector<8x1xf32> to vector<8x256xf32>
    %168 = arith.addf %165, %167 : vector<8x256xf32>
    %cst_83 = arith.constant 1.000000e-01 : f32
    %169 = vector.broadcast %cst_83 : f32 to vector<8x256xf32>
    %170 = arith.mulf %169, %168 : vector<8x256xf32>
    %171 = arith.maximumf %168, %170 : vector<8x256xf32>
    %c0_84 = arith.constant 0 : index
    %c0_85 = arith.constant 0 : index
    %172 = vector.load %arg13[%c0_84, %c0_85] : memref<16x8xf32, #tpu.memory_space<vmem>>, vector<16x8xf32>
    %cst_86 = arith.constant dense<0.000000e+00> : vector<16x256xf32>
    %173 = tpu.matmul %172, %163, %cst_86 {dimension_numbers = #tpu.dot_dimension_numbers<[1], [0], [0], [1], [0, 0, 1, 1], [], []>} : vector<16x8xf32>, vector<8x256xf32>, vector<16x256xf32> -> vector<16x256xf32>
    %c0_87 = arith.constant 0 : index
    %c0_88 = arith.constant 0 : index
    %174 = vector.load %arg14[%c0_87, %c0_88] : memref<16x8xf32, #tpu.memory_space<vmem>>, vector<16x8xf32>
    %cst_89 = arith.constant dense<0.000000e+00> : vector<16x256xf32>
    %175 = tpu.matmul %174, %171, %cst_89 {dimension_numbers = #tpu.dot_dimension_numbers<[1], [0], [0], [1], [0, 0, 1, 1], [], []>} : vector<16x8xf32>, vector<8x256xf32>, vector<16x256xf32> -> vector<16x256xf32>
    %176 = arith.addf %173, %175 : vector<16x256xf32>
    %c0_90 = arith.constant 0 : index
    %c0_91 = arith.constant 0 : index
    %177 = vector.load %arg15[%c0_90, %c0_91] : memref<16x1xf32, #tpu.memory_space<vmem>>, vector<16x1xf32>
    %178 = vector.broadcast %177 : vector<16x1xf32> to vector<16x256xf32>
    %179 = arith.addf %176, %178 : vector<16x256xf32>
    %cst_92 = arith.constant 3.000000e+00 : f32
    %180 = vector.broadcast %cst_92 : f32 to vector<16x256xf32>
    %181 = arith.addf %179, %180 : vector<16x256xf32>
    %cst_93 = arith.constant 0.000000e+00 : f32
    %cst_94 = arith.constant 6.000000e+00 : f32
    %182 = vector.broadcast %cst_93 : f32 to vector<16x256xf32>
    %183 = arith.maximumf %182, %181 : vector<16x256xf32>
    %184 = vector.broadcast %cst_94 : f32 to vector<16x256xf32>
    %185 = arith.minimumf %184, %183 : vector<16x256xf32>
    %186 = arith.mulf %179, %185 : vector<16x256xf32>
    %cst_95 = arith.constant 0.166666672 : f32
    %187 = vector.broadcast %cst_95 : f32 to vector<16x256xf32>
    %188 = arith.mulf %186, %187 : vector<16x256xf32>
    %c0_96 = arith.constant 0 : index
    %c0_97 = arith.constant 0 : index
    %c0_98 = arith.constant 0 : index
    %189 = vector.load %arg16[%c0_96, %c0_97, %c0_98] : memref<1x16x256xf32, #tpu.memory_space<vmem>>, vector<1x16x256xf32>
    %190 = vector.shape_cast %189 : vector<1x16x256xf32> to vector<16x256xf32>
    %191 = vector.shape_cast %188 : vector<16x256xf32> to vector<1x16x256xf32>
    tpu.vector_store %arg16[%c0_96, %c0_97, %c0_98], %191 {strides = array<i32>} : memref<1x16x256xf32, #tpu.memory_space<vmem>>, vector<1x16x256xf32>,
    return
  }
  func.func @transform_0(%arg0: i32) -> (i32, i32, i32) {
    %c0_i32 = arith.constant 0 : i32
    %c0_i32_0 = arith.constant 0 : i32
    %c0_i32_1 = arith.constant 0 : i32
    return %arg0, %c0_i32, %c0_i32_0 : i32, i32, i32
  }
  func.func @transform_1(%arg0: i32) -> (i32, i32, i32) {
    %c0_i32 = arith.constant 0 : i32
    %c0_i32_0 = arith.constant 0 : i32
    %c0_i32_1 = arith.constant 0 : i32
    %c0_i32_2 = arith.constant 0 : i32
    return %c0_i32, %c0_i32_0, %c0_i32_1 : i32, i32, i32
  }
  func.func @transform_2(%arg0: i32) -> (i32, i32) {
    %c0_i32 = arith.constant 0 : i32
    %c0_i32_0 = arith.constant 0 : i32
    %c0_i32_1 = arith.constant 0 : i32
    return %c0_i32, %c0_i32_0 : i32, i32
  }
  func.func @transform_3(%arg0: i32) -> (i32, i32) {
    %c0_i32 = arith.constant 0 : i32
    %c0_i32_0 = arith.constant 0 : i32
    %c0_i32_1 = arith.constant 0 : i32
    return %c0_i32, %c0_i32_0 : i32, i32
  }
  func.func @transform_4(%arg0: i32) -> (i32, i32, i32) {
    %c0_i32 = arith.constant 0 : i32
    %c0_i32_0 = arith.constant 0 : i32
    %c0_i32_1 = arith.constant 0 : i32
    %c0_i32_2 = arith.constant 0 : i32
    return %c0_i32, %c0_i32_0, %c0_i32_1 : i32, i32, i32
  }
  func.func @transform_5(%arg0: i32) -> (i32, i32, i32) {
    %c0_i32 = arith.constant 0 : i32
    %c0_i32_0 = arith.constant 0 : i32
    %c0_i32_1 = arith.constant 0 : i32
    %c0_i32_2 = arith.constant 0 : i32
    return %c0_i32, %c0_i32_0, %c0_i32_1 : i32, i32, i32
  }
  func.func @transform_6(%arg0: i32) -> (i32, i32, i32) {
    %c0_i32 = arith.constant 0 : i32
    %c0_i32_0 = arith.constant 0 : i32
    %c0_i32_1 = arith.constant 0 : i32
    %c0_i32_2 = arith.constant 0 : i32
    return %c0_i32, %c0_i32_0, %c0_i32_1 : i32, i32, i32
  }
  func.func @transform_7(%arg0: i32) -> (i32, i32, i32) {
    %c0_i32 = arith.constant 0 : i32
    %c0_i32_0 = arith.constant 0 : i32
    %c0_i32_1 = arith.constant 0 : i32
    %c0_i32_2 = arith.constant 0 : i32
    return %c0_i32, %c0_i32_0, %c0_i32_1 : i32, i32, i32
  }
  func.func @transform_8(%arg0: i32) -> (i32, i32) {
    %c0_i32 = arith.constant 0 : i32
    %c0_i32_0 = arith.constant 0 : i32
    %c0_i32_1 = arith.constant 0 : i32
    return %c0_i32, %c0_i32_0 : i32, i32
  }
  func.func @transform_9(%arg0: i32) -> (i32, i32) {
    %c0_i32 = arith.constant 0 : i32
    %c0_i32_0 = arith.constant 0 : i32
    %c0_i32_1 = arith.constant 0 : i32
    return %c0_i32, %c0_i32_0 : i32, i32
  }
  func.func @transform_10(%arg0: i32) -> (i32, i32) {
    %c0_i32 = arith.constant 0 : i32
    %c0_i32_0 = arith.constant 0 : i32
    %c0_i32_1 = arith.constant 0 : i32
    return %c0_i32, %c0_i32_0 : i32, i32
  }
  func.func @transform_11(%arg0: i32) -> (i32, i32) {
    %c0_i32 = arith.constant 0 : i32
    %c0_i32_0 = arith.constant 0 : i32
    %c0_i32_1 = arith.constant 0 : i32
    return %c0_i32, %c0_i32_0 : i32, i32
  }
  func.func @transform_12(%arg0: i32) -> (i32, i32) {
    %c0_i32 = arith.constant 0 : i32
    %c0_i32_0 = arith.constant 0 : i32
    %c0_i32_1 = arith.constant 0 : i32
    return %c0_i32, %c0_i32_0 : i32, i32
  }
  func.func @transform_13(%arg0: i32) -> (i32, i32) {
    %c0_i32 = arith.constant 0 : i32
    %c0_i32_0 = arith.constant 0 : i32
    %c0_i32_1 = arith.constant 0 : i32
    return %c0_i32, %c0_i32_0 : i32, i32
  }
  func.func @transform_14(%arg0: i32) -> (i32, i32) {
    %c0_i32 = arith.constant 0 : i32
    %c0_i32_0 = arith.constant 0 : i32
    %c0_i32_1 = arith.constant 0 : i32
    return %c0_i32, %c0_i32_0 : i32, i32
  }
  func.func @transform_15(%arg0: i32) -> (i32, i32, i32) {
    %c0_i32 = arith.constant 0 : i32
    %c0_i32_0 = arith.constant 0 : i32
    %c0_i32_1 = arith.constant 0 : i32
    return %arg0, %c0_i32, %c0_i32_0 : i32, i32, i32
  }
}

</mosaic_0001>

<llo_original>
// kernel: tpu_custom_call.1
$region0: #{tpu_custom_call.1}
  #allocation0 [shape = 'u32[]', space=smem, size = 0x4, offset = 0x4, fixed_abs, tag = 'smem constant byte address 0x4 - core index']
  #allocation1 [shape = 'u32[72,128]{1,0:T(1,128)}', space=vmem, size = 0x9000, scoped, tag = 'internal scratch']
  %s0 = inlined_call_operand.vmem [shape: f32[2,8,256], index: 0, kind: input, shape index: {}]
  %s1 = inlined_call_operand.vmem [shape: f32[8,1,256], index: 1, kind: input, shape index: {}]
  %s2 = inlined_call_operand.vmem [shape: f32[8,8], index: 2, kind: input, shape index: {}]
  %s3 = inlined_call_operand.vmem [shape: f32[8,1], index: 3, kind: input, shape index: {}]
  %s4 = inlined_call_operand.vmem [shape: f32[2,8,8], index: 4, kind: input, shape index: {}]
  %s5 = inlined_call_operand.vmem [shape: f32[2,8,1], index: 5, kind: input, shape index: {}]
  %s6 = inlined_call_operand.vmem [shape: f32[2,8,72], index: 6, kind: input, shape index: {}]
  %s7 = inlined_call_operand.vmem [shape: f32[2,8,1], index: 7, kind: input, shape index: {}]
  %s8 = inlined_call_operand.vmem [shape: f32[8,8], index: 8, kind: input, shape index: {}]
  %s9 = inlined_call_operand.vmem [shape: f32[8,8], index: 9, kind: input, shape index: {}]
  %s10 = inlined_call_operand.vmem [shape: f32[8,1], index: 10, kind: input, shape index: {}]
  %s11 = inlined_call_operand.vmem [shape: f32[8,1], index: 11, kind: input, shape index: {}]
  %s12 = inlined_call_operand.vmem [shape: f32[16,8], index: 12, kind: input, shape index: {}]
  %s13 = inlined_call_operand.vmem [shape: f32[16,8], index: 13, kind: input, shape index: {}]
  %s14 = inlined_call_operand.vmem [shape: f32[16,1], index: 14, kind: input, shape index: {}]
  %s15 = inlined_call_operand.hbm [shape: f32[2,16,256], index: 15, kind: output, shape index: {}]
  %s16 = sld [smem:[#allocation0]]
  $region93: #{tpu_custom_call.1} parent=0
    _
  %s18 = ssub.s32 1, %s16
  %s19 = scalar_select 0, %s18, %s16
  $region1: #{tpu_custom_call.1} parent=0
    #allocation2 [shape = 'u8[32768]{0}', space=vmem, size = 0x8000, scoped, tag = 'output window, operand 0']
    #allocation3 [shape = 's32[2]{0}', space=sflag, size = 0x8, scoped, tag = 'scoped memory for tpu_custom_call.1']
    %20 = vsyncpa [#allocation3], 0
    %s21 = scalar_lea.sflag [#allocation3], 1
    %22 = vsyncpa %s21, 0
    loop: start=0, step=1, limit=4
    $region2: #{tpu_custom_call.1} parent=1 // loop_pre_header
      _
    $region3: #{tpu_custom_call.1} parent=1 // loop_header
      %s24 = sphi 0, %s28
      %p25 = scmp.ge.s32.totalorder %s24, 4
      %s34 = sphi 0, %s36
      %s37 = sphi 0, %s34
      %s38 = sphi 0, %s37
      %s54 = sphi 0, %s38
      %s58 = sphi 0, %s58
      %s60 = sphi 0, %s58
      %s61 = sphi 0, %s60
      %s75 = sphi 0, %s61
      %s79 = sphi 0, %s79
      %s81 = sphi 0, %s79
      %s82 = sphi 0, %s81
      %s96 = sphi 0, %s82
      %s100 = sphi 0, %s100
      %s102 = sphi 0, %s100
      %s103 = sphi 0, %s102
      %s117 = sphi 0, %s103
      %s121 = sphi 0, %s121
      %s123 = sphi 0, %s121
      %s124 = sphi 0, %s123
      %s138 = sphi 0, %s124
      %s142 = sphi 0, %s142
      %s144 = sphi 0, %s142
      %s145 = sphi 0, %s144
      %s159 = sphi 0, %s145
      %s163 = sphi 0, %s163
      %s165 = sphi 0, %s163
      %s166 = sphi 0, %s165
      %s180 = sphi 0, %s166
      %s184 = sphi 0, %s184
      %s186 = sphi 0, %s184
      %s187 = sphi 0, %s186
      %s201 = sphi 0, %s187
      %s205 = sphi 0, %s205
      %s207 = sphi 0, %s205
      %s208 = sphi 0, %s207
      %s222 = sphi 0, %s208
      %s226 = sphi 0, %s226
      %s228 = sphi 0, %s226
      %s229 = sphi 0, %s228
      %s243 = sphi 0, %s229
      %s247 = sphi 0, %s247
      %s249 = sphi 0, %s247
      %s250 = sphi 0, %s249
      %s264 = sphi 0, %s250
      %s268 = sphi 0, %s268
      %s270 = sphi 0, %s268
      %s271 = sphi 0, %s270
      %s285 = sphi 0, %s271
      %s289 = sphi 0, %s289
      %s291 = sphi 0, %s289
      %s292 = sphi 0, %s291
      %s306 = sphi 0, %s292
      %s310 = sphi 0, %s310
      %s312 = sphi 0, %s310
      %s313 = sphi 0, %s312
      %s327 = sphi 0, %s313
      %s331 = sphi 0, %s331
      %s333 = sphi 0, %s331
      %s334 = sphi 0, %s333
      %s348 = sphi 0, %s334
      %s354 = sphi 0, %s356
      %s357 = sphi 0, %s354
      %s358 = sphi 0, %s357
      %s374 = sphi 0, %s358
    $region4: #{tpu_custom_call.1} parent=1 // loop_header_branch
      %27 = sbr.rel (%p25) target = $region8
    $region5: #{tpu_custom_call.1} parent=1 // loop_body
      %s29 = ssub.s32 %s24, 1
      %s30 = ssub.s32 %s24, 2
      %s31 = sadd.s32 %s24, 1
      %s32 = ssub.s32 %s24, %s31
      %p33 = scmp.eq.s32.totalorder %s32, 0
      %s35 = sadd.s32 %s34, 1
      %s36 = scalar_select %p33, %s34, %s35
      %p39 = pneg %p33
      %p40 = scmp.eq.s32.totalorder %s24, 1
      %p41 = por %p39, %p40
      %p42 = scmp.ne.s32.totalorder %s34, %s37
      %p43 = scmp.eq.s32.totalorder %s24, 0
      %p44 = por %p42, %p43
      %p45 = scmp.ne.s32.totalorder %s34, %s37
      %p46 = scmp.eq.s32.totalorder %s29, 1
      %p47 = por %p45, %p46
      %p48 = scmp.ne.s32.totalorder %s37, %s38
      %p49 = scmp.eq.s32.totalorder %s29, 0
      %p50 = por %p48, %p49
      %p51 = scmp.ne.s32.totalorder %s37, %s38
      %p52 = scmp.eq.s32.totalorder %s30, 1
      %p53 = por %p51, %p52
      %p55 = scmp.ne.s32.totalorder %s38, %s54
      %p56 = scmp.eq.s32.totalorder %s30, 0
      %p57 = por %p55, %p56
      %s59 = sadd.s32 %s58, 1
      %p62 = scmp.eq.s32.totalorder %s24, 1
      %p63 = scmp.ne.s32.totalorder %s58, %s60
      %p64 = scmp.eq.s32.totalorder %s24, 0
      %p65 = por %p63, %p64
      %p66 = scmp.ne.s32.totalorder %s58, %s60
      %p67 = scmp.eq.s32.totalorder %s29, 1
      %p68 = por %p66, %p67
      %p69 = scmp.ne.s32.totalorder %s60, %s61
      %p70 = scmp.eq.s32.totalorder %s29, 0
      %p71 = por %p69, %p70
      %p72 = scmp.ne.s32.totalorder %s60, %s61
      %p73 = scmp.eq.s32.totalorder %s30, 1
      %p74 = por %p72, %p73
      %p76 = scmp.ne.s32.totalorder %s61, %s75
      %p77 = scmp.eq.s32.totalorder %s30, 0
      %p78 = por %p76, %p77
      %s80 = sadd.s32 %s79, 1
      %p83 = scmp.eq.s32.totalorder %s24, 1
      %p84 = scmp.ne.s32.totalorder %s79, %s81
      %p85 = scmp.eq.s32.totalorder %s24, 0
      %p86 = por %p84, %p85
      %p87 = scmp.ne.s32.totalorder %s79, %s81
      %p88 = scmp.eq.s32.totalorder %s29, 1
      %p89 = por %p87, %p88
      %p90 = scmp.ne.s32.totalorder %s81, %s82
      %p91 = scmp.eq.s32.totalorder %s29, 0
      %p92 = por %p90, %p91
      %p93 = scmp.ne.s32.totalorder %s81, %s82
      %p94 = scmp.eq.s32.totalorder %s30, 1
      %p95 = por %p93, %p94
      %p97 = scmp.ne.s32.totalorder %s82, %s96
      %p98 = scmp.eq.s32.totalorder %s30, 0
      %p99 = por %p97, %p98
      %s101 = sadd.s32 %s100, 1
      %p104 = scmp.eq.s32.totalorder %s24, 1
      %p105 = scmp.ne.s32.totalorder %s100, %s102
      %p106 = scmp.eq.s32.totalorder %s24, 0
      %p107 = por %p105, %p106
      %p108 = scmp.ne.s32.totalorder %s100, %s102
      %p109 = scmp.eq.s32.totalorder %s29, 1
      %p110 = por %p108, %p109
      %p111 = scmp.ne.s32.totalorder %s102, %s103
      %p112 = scmp.eq.s32.totalorder %s29, 0
      %p113 = por %p111, %p112
      %p114 = scmp.ne.s32.totalorder %s102, %s103
      %p115 = scmp.eq.s32.totalorder %s30, 1
      %p116 = por %p114, %p115
      %p118 = scmp.ne.s32.totalorder %s103, %s117
      %p119 = scmp.eq.s32.totalorder %s30, 0
      %p120 = por %p118, %p119
      %s122 = sadd.s32 %s121, 1
      %p125 = scmp.eq.s32.totalorder %s24, 1
      %p126 = scmp.ne.s32.totalorder %s121, %s123
      %p127 = scmp.eq.s32.totalorder %s24, 0
      %p128 = por %p126, %p127
      %p129 = scmp.ne.s32.totalorder %s121, %s123
      %p130 = scmp.eq.s32.totalorder %s29, 1
      %p131 = por %p129, %p130
      %p132 = scmp.ne.s32.totalorder %s123, %s124
      %p133 = scmp.eq.s32.totalorder %s29, 0
      %p134 = por %p132, %p133
      %p135 = scmp.ne.s32.totalorder %s123, %s124
      %p136 = scmp.eq.s32.totalorder %s30, 1
      %p137 = por %p135, %p136
      %p139 = scmp.ne.s32.totalorder %s124, %s138
      %p140 = scmp.eq.s32.totalorder %s30, 0
      %p141 = por %p139, %p140
      %s143 = sadd.s32 %s142, 1
      %p146 = scmp.eq.s32.totalorder %s24, 1
      %p147 = scmp.ne.s32.totalorder %s142, %s144
      %p148 = scmp.eq.s32.totalorder %s24, 0
      %p149 = por %p147, %p148
      %p150 = scmp.ne.s32.totalorder %s142, %s144
      %p151 = scmp.eq.s32.totalorder %s29, 1
      %p152 = por %p150, %p151
      %p153 = scmp.ne.s32.totalorder %s144, %s145
      %p154 = scmp.eq.s32.totalorder %s29, 0
      %p155 = por %p153, %p154
      %p156 = scmp.ne.s32.totalorder %s144, %s145
      %p157 = scmp.eq.s32.totalorder %s30, 1
      %p158 = por %p156, %p157
      %p160 = scmp.ne.s32.totalorder %s145, %s159
      %p161 = scmp.eq.s32.totalorder %s30, 0
      %p162 = por %p160, %p161
      %s164 = sadd.s32 %s163, 1
      %p167 = scmp.eq.s32.totalorder %s24, 1
      %p168 = scmp.ne.s32.totalorder %s163, %s165
      %p169 = scmp.eq.s32.totalorder %s24, 0
      %p170 = por %p168, %p169
      %p171 = scmp.ne.s32.totalorder %s163, %s165
      %p172 = scmp.eq.s32.totalorder %s29, 1
      %p173 = por %p171, %p172
      %p174 = scmp.ne.s32.totalorder %s165, %s166
      %p175 = scmp.eq.s32.totalorder %s29, 0
      %p176 = por %p174, %p175
      %p177 = scmp.ne.s32.totalorder %s165, %s166
      %p178 = scmp.eq.s32.totalorder %s30, 1
      %p179 = por %p177, %p178
      %p181 = scmp.ne.s32.totalorder %s166, %s180
      %p182 = scmp.eq.s32.totalorder %s30, 0
      %p183 = por %p181, %p182
      %s185 = sadd.s32 %s184, 1
      %p188 = scmp.eq.s32.totalorder %s24, 1
      %p189 = scmp.ne.s32.totalorder %s184, %s186
      %p190 = scmp.eq.s32.totalorder %s24, 0
      %p191 = por %p189, %p190
      %p192 = scmp.ne.s32.totalorder %s184, %s186
      %p193 = scmp.eq.s32.totalorder %s29, 1
      %p194 = por %p192, %p193
      %p195 = scmp.ne.s32.totalorder %s186, %s187
      %p196 = scmp.eq.s32.totalorder %s29, 0
      %p197 = por %p195, %p196
      %p198 = scmp.ne.s32.totalorder %s186, %s187
      %p199 = scmp.eq.s32.totalorder %s30, 1
      %p200 = por %p198, %p199
      %p202 = scmp.ne.s32.totalorder %s187, %s201
      %p203 = scmp.eq.s32.totalorder %s30, 0
      %p204 = por %p202, %p203
      %s206 = sadd.s32 %s205, 1
      %p209 = scmp.eq.s32.totalorder %s24, 1
      %p210 = scmp.ne.s32.totalorder %s205, %s207
      %p211 = scmp.eq.s32.totalorder %s24, 0
      %p212 = por %p210, %p211
      %p213 = scmp.ne.s32.totalorder %s205, %s207
      %p214 = scmp.eq.s32.totalorder %s29, 1
      %p215 = por %p213, %p214
      %p216 = scmp.ne.s32.totalorder %s207, %s208
      %p217 = scmp.eq.s32.totalorder %s29, 0
      %p218 = por %p216, %p217
      %p219 = scmp.ne.s32.totalorder %s207, %s208
      %p220 = scmp.eq.s32.totalorder %s30, 1
      %p221 = por %p219, %p220
      %p223 = scmp.ne.s32.totalorder %s208, %s222
      %p224 = scmp.eq.s32.totalorder %s30, 0
      %p225 = por %p223, %p224
      %s227 = sadd.s32 %s226, 1
      %p230 = scmp.eq.s32.totalorder %s24, 1
      %p231 = scmp.ne.s32.totalorder %s226, %s228
      %p232 = scmp.eq.s32.totalorder %s24, 0
      %p233 = por %p231, %p232
      %p234 = scmp.ne.s32.totalorder %s226, %s228
      %p235 = scmp.eq.s32.totalorder %s29, 1
      %p236 = por %p234, %p235
      %p237 = scmp.ne.s32.totalorder %s228, %s229
      %p238 = scmp.eq.s32.totalorder %s29, 0
      %p239 = por %p237, %p238
      %p240 = scmp.ne.s32.totalorder %s228, %s229
      %p241 = scmp.eq.s32.totalorder %s30, 1
      %p242 = por %p240, %p241
      %p244 = scmp.ne.s32.totalorder %s229, %s243
      %p245 = scmp.eq.s32.totalorder %s30, 0
      %p246 = por %p244, %p245
      %s248 = sadd.s32 %s247, 1
      %p251 = scmp.eq.s32.totalorder %s24, 1
      %p252 = scmp.ne.s32.totalorder %s247, %s249
      %p253 = scmp.eq.s32.totalorder %s24, 0
      %p254 = por %p252, %p253
      %p255 = scmp.ne.s32.totalorder %s247, %s249
      %p256 = scmp.eq.s32.totalorder %s29, 1
      %p257 = por %p255, %p256
      %p258 = scmp.ne.s32.totalorder %s249, %s250
      %p259 = scmp.eq.s32.totalorder %s29, 0
      %p260 = por %p258, %p259
      %p261 = scmp.ne.s32.totalorder %s249, %s250
      %p262 = scmp.eq.s32.totalorder %s30, 1
      %p263 = por %p261, %p262
      %p265 = scmp.ne.s32.totalorder %s250, %s264
      %p266 = scmp.eq.s32.totalorder %s30, 0
      %p267 = por %p265, %p266
      %s269 = sadd.s32 %s268, 1
      %p272 = scmp.eq.s32.totalorder %s24, 1
      %p273 = scmp.ne.s32.totalorder %s268, %s270
      %p274 = scmp.eq.s32.totalorder %s24, 0
      %p275 = por %p273, %p274
      %p276 = scmp.ne.s32.totalorder %s268, %s270
      %p277 = scmp.eq.s32.totalorder %s29, 1
      %p278 = por %p276, %p277
      %p279 = scmp.ne.s32.totalorder %s270, %s271
      %p280 = scmp.eq.s32.totalorder %s29, 0
      %p281 = por %p279, %p280
      %p282 = scmp.ne.s32.totalorder %s270, %s271
      %p283 = scmp.eq.s32.totalorder %s30, 1
      %p284 = por %p282, %p283
      %p286 = scmp.ne.s32.totalorder %s271, %s285
      %p287 = scmp.eq.s32.totalorder %s30, 0
      %p288 = por %p286, %p287
      %s290 = sadd.s32 %s289, 1
      %p293 = scmp.eq.s32.totalorder %s24, 1
      %p294 = scmp.ne.s32.totalorder %s289, %s291
      %p295 = scmp.eq.s32.totalorder %s24, 0
      %p296 = por %p294, %p295
      %p297 = scmp.ne.s32.totalorder %s289, %s291
      %p298 = scmp.eq.s32.totalorder %s29, 1
      %p299 = por %p297, %p298
      %p300 = scmp.ne.s32.totalorder %s291, %s292
      %p301 = scmp.eq.s32.totalorder %s29, 0
      %p302 = por %p300, %p301
      %p303 = scmp.ne.s32.totalorder %s291, %s292
      %p304 = scmp.eq.s32.totalorder %s30, 1
      %p305 = por %p303, %p304
      %p307 = scmp.ne.s32.totalorder %s292, %s306
      %p308 = scmp.eq.s32.totalorder %s30, 0
      %p309 = por %p307, %p308
      %s311 = sadd.s32 %s310, 1
      %p314 = scmp.eq.s32.totalorder %s24, 1
      %p315 = scmp.ne.s32.totalorder %s310, %s312
      %p316 = scmp.eq.s32.totalorder %s24, 0
      %p317 = por %p315, %p316
      %p318 = scmp.ne.s32.totalorder %s310, %s312
      %p319 = scmp.eq.s32.totalorder %s29, 1
      %p320 = por %p318, %p319
      %p321 = scmp.ne.s32.totalorder %s312, %s313
      %p322 = scmp.eq.s32.totalorder %s29, 0
      %p323 = por %p321, %p322
      %p324 = scmp.ne.s32.totalorder %s312, %s313
      %p325 = scmp.eq.s32.totalorder %s30, 1
      %p326 = por %p324, %p325
      %p328 = scmp.ne.s32.totalorder %s313, %s327
      %p329 = scmp.eq.s32.totalorder %s30, 0
      %p330 = por %p328, %p329
      %s332 = sadd.s32 %s331, 1
      %p335 = scmp.eq.s32.totalorder %s24, 1
      %p336 = scmp.ne.s32.totalorder %s331, %s333
      %p337 = scmp.eq.s32.totalorder %s24, 0
      %p338 = por %p336, %p337
      %p339 = scmp.ne.s32.totalorder %s331, %s333
      %p340 = scmp.eq.s32.totalorder %s29, 1
      %p341 = por %p339, %p340
      %p342 = scmp.ne.s32.totalorder %s333, %s334
      %p343 = scmp.eq.s32.totalorder %s29, 0
      %p344 = por %p342, %p343
      %p345 = scmp.ne.s32.totalorder %s333, %s334
      %p346 = scmp.eq.s32.totalorder %s30, 1
      %p347 = por %p345, %p346
      %p349 = scmp.ne.s32.totalorder %s334, %s348
      %p350 = scmp.eq.s32.totalorder %s30, 0
      %p351 = por %p349, %p350
      %s352 = ssub.s32 %s24, %s31
      %p353 = scmp.eq.s32.totalorder %s352, 0
      %s355 = sadd.s32 %s354, 1
      %s356 = scalar_select %p353, %s354, %s355
      %p359 = pneg %p353
      %p360 = scmp.eq.s32.totalorder %s24, 1
      %p361 = por %p359, %p360
      %p362 = scmp.ne.s32.totalorder %s354, %s357
      %p363 = scmp.eq.s32.totalorder %s24, 0
      %p364 = por %p362, %p363
      %p365 = scmp.ne.s32.totalorder %s354, %s357
      %p366 = scmp.eq.s32.totalorder %s29, 1
      %p367 = por %p365, %p366
      %p368 = scmp.ne.s32.totalorder %s357, %s358
      %p369 = scmp.eq.s32.totalorder %s29, 0
      %p370 = por %p368, %p369
      %p371 = scmp.ne.s32.totalorder %s357, %s358
      %p372 = scmp.eq.s32.totalorder %s30, 1
      %p373 = por %p371, %p372
      %p375 = scmp.ne.s32.totalorder %s358, %s374
      %p376 = scmp.eq.s32.totalorder %s30, 0
      %p377 = por %p375, %p376
      %p378 = scmp.le.s32.totalorder 1, %s24
      %p379 = scmp.lt.s32.totalorder %s24, 3
      %p380 = pnand %p378, %p379
      %p381 = pneg %p380
      // Predicated region
      $region9: #{tpu_custom_call.1} parent=5 // pred_check
        _
      $region10: #{tpu_custom_call.1} parent=5 // pred_check_branch
        %383 = sbr.rel (%p380) target = $region12
      $region11: #{tpu_custom_call.1} parent=5 // pred_region
        %s384 = ssub.s32 %s24, 1
        // Predicated region
        $region13: #{tpu_custom_call.1} parent=11 // pred_check
          %p385 = pneg %p71
        $region14: #{tpu_custom_call.1} parent=11 // pred_check_branch
          %387 = sbr.rel (%p385) target = $region16
        $region15: #{tpu_custom_call.1} parent=11 // pred_region
          _
        $region16: #{tpu_custom_call.1} parent=11 // pred_fallthru
          _
        // Predicated region
        $region17: #{tpu_custom_call.1} parent=11 // pred_check
          %p388 = pneg %p92
        $region18: #{tpu_custom_call.1} parent=11 // pred_check_branch
          %390 = sbr.rel (%p388) target = $region20
        $region19: #{tpu_custom_call.1} parent=11 // pred_region
          _
        $region20: #{tpu_custom_call.1} parent=11 // pred_fallthru
          _
        // Predicated region
        $region21: #{tpu_custom_call.1} parent=11 // pred_check
          %p391 = pneg %p113
        $region22: #{tpu_custom_call.1} parent=11 // pred_check_branch
          %393 = sbr.rel (%p391) target = $region24
        $region23: #{tpu_custom_call.1} parent=11 // pred_region
          _
        $region24: #{tpu_custom_call.1} parent=11 // pred_fallthru
          _
        // Predicated region
        $region25: #{tpu_custom_call.1} parent=11 // pred_check
          %p394 = pneg %p134
        $region26: #{tpu_custom_call.1} parent=11 // pred_check_branch
          %396 = sbr.rel (%p394) target = $region28
        $region27: #{tpu_custom_call.1} parent=11 // pred_region
          _
        $region28: #{tpu_custom_call.1} parent=11 // pred_fallthru
          _
        // Predicated region
        $region29: #{tpu_custom_call.1} parent=11 // pred_check
          %p397 = pneg %p155
        $region30: #{tpu_custom_call.1} parent=11 // pred_check_branch
          %399 = sbr.rel (%p397) target = $region32
        $region31: #{tpu_custom_call.1} parent=11 // pred_region
          _
        $region32: #{tpu_custom_call.1} parent=11 // pred_fallthru
          _
        // Predicated region
        $region33: #{tpu_custom_call.1} parent=11 // pred_check
          %p400 = pneg %p176
        $region34: #{tpu_custom_call.1} parent=11 // pred_check_branch
          %402 = sbr.rel (%p400) target = $region36
        $region35: #{tpu_custom_call.1} parent=11 // pred_region
          _
        $region36: #{tpu_custom_call.1} parent=11 // pred_fallthru
          _
        // Predicated region
        $region37: #{tpu_custom_call.1} parent=11 // pred_check
          %p403 = pneg %p197
        $region38: #{tpu_custom_call.1} parent=11 // pred_check_branch
          %405 = sbr.rel (%p403) target = $region40
        $region39: #{tpu_custom_call.1} parent=11 // pred_region
          _
        $region40: #{tpu_custom_call.1} parent=11 // pred_fallthru
          _
        // Predicated region
        $region41: #{tpu_custom_call.1} parent=11 // pred_check
          %p406 = pneg %p218
        $region42: #{tpu_custom_call.1} parent=11 // pred_check_branch
          %408 = sbr.rel (%p406) target = $region44
        $region43: #{tpu_custom_call.1} parent=11 // pred_region
          _
        $region44: #{tpu_custom_call.1} parent=11 // pred_fallthru
          _
        // Predicated region
        $region45: #{tpu_custom_call.1} parent=11 // pred_check
          %p409 = pneg %p239
        $region46: #{tpu_custom_call.1} parent=11 // pred_check_branch
          %411 = sbr.rel (%p409) target = $region48
        $region47: #{tpu_custom_call.1} parent=11 // pred_region
          _
        $region48: #{tpu_custom_call.1} parent=11 // pred_fallthru
          _
        // Predicated region
        $region49: #{tpu_custom_call.1} parent=11 // pred_check
          %p412 = pneg %p260
        $region50: #{tpu_custom_call.1} parent=11 // pred_check_branch
          %414 = sbr.rel (%p412) target = $region52
        $region51: #{tpu_custom_call.1} parent=11 // pred_region
          _
        $region52: #{tpu_custom_call.1} parent=11 // pred_fallthru
          _
        // Predicated region
        $region53: #{tpu_custom_call.1} parent=11 // pred_check
          %p415 = pneg %p281
        $region54: #{tpu_custom_call.1} parent=11 // pred_check_branch
          %417 = sbr.rel (%p415) target = $region56
        $region55: #{tpu_custom_call.1} parent=11 // pred_region
          _
        $region56: #{tpu_custom_call.1} parent=11 // pred_fallthru
          _
        // Predicated region
        $region57: #{tpu_custom_call.1} parent=11 // pred_check
          %p418 = pneg %p302
        $region58: #{tpu_custom_call.1} parent=11 // pred_check_branch
          %420 = sbr.rel (%p418) target = $region60
        $region59: #{tpu_custom_call.1} parent=11 // pred_region
          _
        $region60: #{tpu_custom_call.1} parent=11 // pred_fallthru
          _
        // Predicated region
        $region61: #{tpu_custom_call.1} parent=11 // pred_check
          %p421 = pneg %p323
        $region62: #{tpu_custom_call.1} parent=11 // pred_check_branch
          %423 = sbr.rel (%p421) target = $region64
        $region63: #{tpu_custom_call.1} parent=11 // pred_region
          _
        $region64: #{tpu_custom_call.1} parent=11 // pred_fallthru
          _
        // Predicated region
        $region65: #{tpu_custom_call.1} parent=11 // pred_check
          %p424 = pneg %p344
        $region66: #{tpu_custom_call.1} parent=11 // pred_check_branch
          %426 = sbr.rel (%p424) target = $region68
        $region67: #{tpu_custom_call.1} parent=11 // pred_region
          _
        $region68: #{tpu_custom_call.1} parent=11 // pred_fallthru
          _
      $region12: #{tpu_custom_call.1} parent=5 // pred_fallthru
        _
      %p427 = scmp.lt.s32.totalorder %s24, 2
      // Predicated region
      $region69: #{tpu_custom_call.1} parent=5 // pred_check
        %p428 = pneg %p427
      $region70: #{tpu_custom_call.1} parent=5 // pred_check_branch
        %430 = sbr.rel (%p428) target = $region72
      $region71: #{tpu_custom_call.1} parent=5 // pred_region
        // Predicated region
        $region73: #{tpu_custom_call.1} parent=71 // pred_check
          %p431 = pneg %p44
        $region74: #{tpu_custom_call.1} parent=71 // pred_check_branch
          %433 = sbr.rel (%p431) target = $region76
        $region75: #{tpu_custom_call.1} parent=71 // pred_region
          %p434 = scmp.lt.s32.totalorder %s24, 1
          %s435 = scalar_select %p434, %s24, 1
          %s436 = smul.addr %s435, 2
          %s437 = smul.addr %s436, 8
          %s438 = scalar_lea.vmem %s0, %s437
        $region76: #{tpu_custom_call.1} parent=71 // pred_fallthru
          _
      $region72: #{tpu_custom_call.1} parent=5 // pred_fallthru
        _
      %p439 = scmp.le.s32.totalorder 1, %s24
      %p440 = scmp.lt.s32.totalorder %s24, 3
      %p441 = pnand %p439, %p440
      %p442 = pneg %p441
      // Predicated region
      $region77: #{tpu_custom_call.1} parent=5 // pred_check
        _
      $region78: #{tpu_custom_call.1} parent=5 // pred_check_branch
        %444 = sbr.rel (%p441) target = $region80
      $region79: #{tpu_custom_call.1} parent=5 // pred_region
        %s445 = ssub.s32 %s24, 1
        %p446 = scmp.lt.s32.totalorder %s29, 1
        %s447 = scalar_select %p446, %s29, 1
        %s448 = smul.addr %s447, 2
        %s449 = smul.addr %s448, 8
        %s450 = scalar_lea.vmem %s0, %s449
        %p451 = pneg %p50
        %p452 = pneg %p47
        %p453 = pneg %p71
        %p454 = pneg %p68
        %p455 = pneg %p92
        %p456 = pneg %p89
        %p457 = pneg %p113
        %p458 = pneg %p110
        %p459 = pneg %p134
        %p460 = pneg %p131
        %p461 = pneg %p155
        %p462 = pneg %p152
        %p463 = pneg %p176
        %p464 = pneg %p173
        %p465 = pneg %p197
        %p466 = pneg %p194
        %p467 = pneg %p218
        %p468 = pneg %p215
        %p469 = pneg %p239
        %p470 = pneg %p236
        %p471 = pneg %p260
        %p472 = pneg %p257
        %p473 = pneg %p281
        %p474 = pneg %p278
        %p475 = pneg %p302
        %p476 = pneg %p299
        %p477 = pneg %p323
        %p478 = pneg %p320
        %p479 = pneg %p344
        %p480 = pneg %p341
        %p481 = pneg %p370
        %p482 = pneg %p367
        %s483 = sand.u32 %s357, 1
        %s484 = scalar_lea.sflag [#allocation3], %s483
        %s485 = sand.u32 %s357, 1
        %s486 = smul.addr %s485, 32
        %s487 = scalar_lea.vmem [#allocation2], %s486
        %p488 = scmp.lt.s32.totalorder %s29, 1
        %s489 = scalar_select %p488, %s29, 1
        %s490 = smul.addr %s489, 2
        %s491 = smul.addr %s490, 8
        %s492 = scalar_lea.vmem %s0, %s491
        %v493 = vld [vmem:[%s492] sm:$0xff]
        %v494 = vld [vmem:[%s492 + $0x8] sm:$0xff]
        %v495 = vld [vmem:[%s1] sm:$0x3]
        %s496 = scalar_lea.vmem %s1, 2
        %v497 = vld [vmem:[%s496] sm:$0x3]
        %s498 = scalar_lea.vmem %s1, 4
        %v499 = vld [vmem:[%s498] sm:$0x3]
        %s500 = scalar_lea.vmem %s1, 6
        %v501 = vld [vmem:[%s500] sm:$0x3]
        %s502 = scalar_lea.vmem %s1, 8
        %v503 = vld [vmem:[%s502] sm:$0x3]
        %s504 = scalar_lea.vmem %s1, 10
        %v505 = vld [vmem:[%s504] sm:$0x3]
        %s506 = scalar_lea.vmem %s1, 12
        %v507 = vld [vmem:[%s506] sm:$0x3]
        %s508 = scalar_lea.vmem %s1, 14
        %v509 = vld [vmem:[%s508] sm:$0x3]
        %v510 = vld [vmem:[%s2] sm:$0xff]
        %v511 = vld [vmem:[%s3] sm:$0xff]
        %513 = vset.pattern.permute.xlu0 0
        %514 = vperm.xlu0 %513, %v511
        %v515 = vpop.permute.xlu0 %514
        %vm517 = vcmask 64512
        %v519 = vsel %vm517, %v510, 0
        %521 = vmatpush.msra.mxu0 0.0
        %522 = vmatpush.msra.mxu0 0.0
        %523 = vmatpush.msra.mxu0 0.0
        %524 = vmatpush.msra.mxu0 0.0
        %525 = vmatpush.msra.mxu0 0.0
        %526 = vmatpush.msra.mxu0 0.0
        %527 = vmatpush.msra.mxu0 0.0
        %528 = vmatpush.msra.mxu0 0.0
        %529 = vmatpush.msra.mxu0 0.0
        %530 = vmatpush.msra.mxu0 0.0
        %531 = vmatpush.msra.mxu0 0.0
        %532 = vmatpush.msra.mxu0 0.0
        %533 = vmatpush.msra.mxu0 0.0
        %534 = vmatpush.msra.mxu0 0.0
        %535 = vmatpush.msra.mxu0 0.0
        %536 = vmatpush.msra.mxu0 %v493
        %537 = vmatmul.f32.gmra.mxu0 %v519
        %v538 = vpop.f32.mrf.mxu0
        %v539 = vadd.f32 %v515, %v538
        %540 = vdwg.mxu0
        %541 = vmatpush.msra.mxu0 0.0
        %542 = vmatpush.msra.mxu0 0.0
        %543 = vmatpush.msra.mxu0 0.0
        %544 = vmatpush.msra.mxu0 0.0
        %545 = vmatpush.msra.mxu0 0.0
        %546 = vmatpush.msra.mxu0 0.0
        %547 = vmatpush.msra.mxu0 0.0
        %548 = vmatpush.msra.mxu0 0.0
        %549 = vmatpush.msra.mxu0 0.0
        %550 = vmatpush.msra.mxu0 0.0
        %551 = vmatpush.msra.mxu0 0.0
        %552 = vmatpush.msra.mxu0 0.0
        %553 = vmatpush.msra.mxu0 0.0
        %554 = vmatpush.msra.mxu0 0.0
        %555 = vmatpush.msra.mxu0 0.0
        %556 = vmatpush.msra.mxu0 %v494
        %557 = vmatmul.f32.gmra.mxu0 %v519
        %v558 = vpop.f32.mrf.mxu0
        %v559 = vadd.f32 %v515, %v558
        %560 = vdwg.mxu0
        %v561 = vadd.f32 %v539, 3.0
        %v562 = vadd.f32 %v559, 3.0
        %v563 = vmax.f32 %v561, 0.0
        %v564 = vmax.f32 %v562, 0.0
        %v565 = vmin.f32 %v563, 6.0
        %v566 = vmin.f32 %v564, 6.0
        %v567 = vmul.f32 %v539, %v565
        %v568 = vmul.f32 %v559, %v566
        %v569 = vmul.f32 %v567, 0.16666667
        %v570 = vmul.f32 %v568, 0.16666667
        %v571 = vld [vmem:[%s4] sm:$0xff]
        %v572 = vld [vmem:[%s5] sm:$0xff]
        %574 = vset.pattern.permute.xlu0 0
        %575 = vperm.xlu0 %574, %v572
        %v576 = vpop.permute.xlu0 %575
        %v579 = vsel %vm517, %v571, 0
        %581 = vmatpush.msra.mxu0 0.0
        %582 = vmatpush.msra.mxu0 0.0
        %583 = vmatpush.msra.mxu0 0.0
        %584 = vmatpush.msra.mxu0 0.0
        %585 = vmatpush.msra.mxu0 0.0
        %586 = vmatpush.msra.mxu0 0.0
        %587 = vmatpush.msra.mxu0 0.0
        %588 = vmatpush.msra.mxu0 0.0
        %589 = vmatpush.msra.mxu0 0.0
        %590 = vmatpush.msra.mxu0 0.0
        %591 = vmatpush.msra.mxu0 0.0
        %592 = vmatpush.msra.mxu0 0.0
        %593 = vmatpush.msra.mxu0 0.0
        %594 = vmatpush.msra.mxu0 0.0
        %595 = vmatpush.msra.mxu0 0.0
        %596 = vmatpush.msra.mxu0 %v569
        %597 = vmatmul.f32.gmra.mxu0 %v579
        %v598 = vpop.f32.mrf.mxu0
        %v599 = vadd.f32 %v576, %v598
        %600 = vdwg.mxu0
        %601 = vmatpush.msra.mxu0 0.0
        %602 = vmatpush.msra.mxu0 0.0
        %603 = vmatpush.msra.mxu0 0.0
        %604 = vmatpush.msra.mxu0 0.0
        %605 = vmatpush.msra.mxu0 0.0
        %606 = vmatpush.msra.mxu0 0.0
        %607 = vmatpush.msra.mxu0 0.0
        %608 = vmatpush.msra.mxu0 0.0
        %609 = vmatpush.msra.mxu0 0.0
        %610 = vmatpush.msra.mxu0 0.0
        %611 = vmatpush.msra.mxu0 0.0
        %612 = vmatpush.msra.mxu0 0.0
        %613 = vmatpush.msra.mxu0 0.0
        %614 = vmatpush.msra.mxu0 0.0
        %615 = vmatpush.msra.mxu0 0.0
        %616 = vmatpush.msra.mxu0 %v570
        %617 = vmatmul.f32.gmra.mxu0 %v579
        %v618 = vpop.f32.mrf.mxu0
        %v619 = vadd.f32 %v576, %v618
        %620 = vdwg.mxu0
        %v621 = vadd.f32 %v599, 3.0
        %v622 = vadd.f32 %v619, 3.0
        %v623 = vmax.f32 %v621, 0.0
        %v624 = vmax.f32 %v622, 0.0
        %v625 = vmin.f32 %v623, 6.0
        %v626 = vmin.f32 %v624, 6.0
        %v627 = vmul.f32 %v599, %v625
        %v628 = vmul.f32 %v619, %v626
        %v629 = vmul.f32 %v627, 0.16666667
        %v630 = vmul.f32 %v628, 0.16666667
        %631 = vrot.lane.b32.xlu0 %v629, 17
        %v632 = vpop.permute.xlu0 %631
        %633 = vrot.lane.b32.xlu0 %v630, 17
        %v634 = vpop.permute.xlu0 %633
        %v635 = vlaneseq
        %v636 = vand.u32 %v635, 127
        %vm637 = vcmp.lt.s32.totalorder %v636, 17
        %v638 = vsel %vm637, %v632, %v634
        %v639 = vsel %vm637, %v634, %v632
        %v641 = vperm.slane %v495, 0
        %v642 = vperm.slane %v495, 1
        %v645 = vmul.f32 %v639, %v641
        %v646 = vmul.f32 %v638, %v642
        %647 = vrot.lane.b32.xlu0 %v629, 16
        %v648 = vpop.permute.xlu0 %647
        %649 = vrot.lane.b32.xlu0 %v630, 16
        %v650 = vpop.permute.xlu0 %649
        %vm651 = vcmp.lt.s32.totalorder %v636, 16
        %v652 = vsel %vm651, %v648, %v650
        %v653 = vsel %vm651, %v650, %v648
        %v655 = vperm.slane %v497, 0
        %v656 = vperm.slane %v497, 1
        %v659 = vmul.f32 %v653, %v655
        %v660 = vmul.f32 %v652, %v656
        %661 = vrot.lane.b32.xlu0 %v629, 15
        %v662 = vpop.permute.xlu0 %661
        %663 = vrot.lane.b32.xlu0 %v630, 15
        %v664 = vpop.permute.xlu0 %663
        %vm665 = vcmp.lt.s32.totalorder %v636, 15
        %v666 = vsel %vm665, %v662, %v664
        %v667 = vsel %vm665, %v664, %v662
        %v669 = vperm.slane %v499, 0
        %v670 = vperm.slane %v499, 1
        %v673 = vmul.f32 %v667, %v669
        %v674 = vmul.f32 %v666, %v670
        %675 = vrot.lane.b32.xlu0 %v629, 1
        %v676 = vpop.permute.xlu0 %675
        %677 = vrot.lane.b32.xlu0 %v630, 1
        %v678 = vpop.permute.xlu0 %677
        %vm679 = vcmp.lt.s32.totalorder %v636, 1
        %v680 = vsel %vm679, %v676, %v678
        %v681 = vsel %vm679, %v678, %v676
        %v683 = vperm.slane %v501, 0
        %v684 = vperm.slane %v501, 1
        %v687 = vmul.f32 %v681, %v683
        %v688 = vmul.f32 %v680, %v684
        %689 = vrot.lane.b32.xlu0 %v629, 127
        %v690 = vpop.permute.xlu0 %689
        %691 = vrot.lane.b32.xlu0 %v630, 127
        %v692 = vpop.permute.xlu0 %691
        %vm693 = vcmp.lt.s32.totalorder %v636, 127
        %v694 = vsel %vm693, %v690, %v692
        %v695 = vsel %vm693, %v692, %v690
        %v697 = vperm.slane %v503, 0
        %v698 = vperm.slane %v503, 1
        %v701 = vmul.f32 %v694, %v697
        %v702 = vmul.f32 %v695, %v698
        %703 = vrot.lane.b32.xlu0 %v629, 113
        %v704 = vpop.permute.xlu0 %703
        %705 = vrot.lane.b32.xlu0 %v630, 113
        %v706 = vpop.permute.xlu0 %705
        %vm707 = vcmp.lt.s32.totalorder %v636, 113
        %v708 = vsel %vm707, %v704, %v706
        %v709 = vsel %vm707, %v706, %v704
        %v711 = vperm.slane %v505, 0
        %v712 = vperm.slane %v505, 1
        %v715 = vmul.f32 %v708, %v711
        %v716 = vmul.f32 %v709, %v712
        %717 = vrot.lane.b32.xlu0 %v629, 112
        %v718 = vpop.permute.xlu0 %717
        %719 = vrot.lane.b32.xlu0 %v630, 112
        %v720 = vpop.permute.xlu0 %719
        %vm721 = vcmp.lt.s32.totalorder %v636, 112
        %v722 = vsel %vm721, %v718, %v720
        %v723 = vsel %vm721, %v720, %v718
        %v725 = vperm.slane %v507, 0
        %v726 = vperm.slane %v507, 1
        %v729 = vmul.f32 %v722, %v725
        %v730 = vmul.f32 %v723, %v726
        %731 = vrot.lane.b32.xlu0 %v629, 111
        %v732 = vpop.permute.xlu0 %731
        %733 = vrot.lane.b32.xlu0 %v630, 111
        %v734 = vpop.permute.xlu0 %733
        %vm735 = vcmp.lt.s32.totalorder %v636, 111
        %v736 = vsel %vm735, %v732, %v734
        %v737 = vsel %vm735, %v734, %v732
        %v739 = vperm.slane %v509, 0
        %v740 = vperm.slane %v509, 1
        %v743 = vmul.f32 %v736, %v739
        %v744 = vmul.f32 %v737, %v740
        %v745 = vld [vmem:[%s6] sm:$0xff]
        %v746 = vld [vmem:[%s7] sm:$0xff]
        %748 = vset.pattern.permute.xlu0 0
        %749 = vperm.xlu0 %748, %v746
        %v750 = vpop.permute.xlu0 %749
        %vm752 = vcmask 588800
        %v754 = vsel %vm752, %v745, 0
        %756 = vmatpush.msra.mxu0 0.0
        %757 = vmatpush.msra.mxu0 0.0
        %758 = vmatpush.msra.mxu0 0.0
        %759 = vmatpush.msra.mxu0 0.0
        %760 = vmatpush.msra.mxu0 0.0
        %761 = vmatpush.msra.mxu0 0.0
        %762 = vmatpush.msra.mxu0 0.0
        %763 = vmatpush.msra.mxu0 %v743
        %764 = vmatpush.msra.mxu0 %v729
        %765 = vmatpush.msra.mxu0 %v715
        %766 = vmatpush.msra.mxu0 %v701
        %767 = vmatpush.msra.mxu0 %v629
        %768 = vmatpush.msra.mxu0 %v687
        %769 = vmatpush.msra.mxu0 %v673
        %770 = vmatpush.msra.mxu0 %v659
        %771 = vmatpush.msra.mxu0 %v645
        %772 = vmatmul.f32.gmra.mxu0 %v754
        %v773 = vpop.f32.mrf.mxu0
        %v774 = vadd.f32 %v750, %v773
        %775 = vdwg.mxu0
        %776 = vmatpush.msra.mxu0 0.0
        %777 = vmatpush.msra.mxu0 0.0
        %778 = vmatpush.msra.mxu0 0.0
        %779 = vmatpush.msra.mxu0 0.0
        %780 = vmatpush.msra.mxu0 0.0
        %781 = vmatpush.msra.mxu0 0.0
        %782 = vmatpush.msra.mxu0 0.0
        %783 = vmatpush.msra.mxu0 %v744
        %784 = vmatpush.msra.mxu0 %v730
        %785 = vmatpush.msra.mxu0 %v716
        %786 = vmatpush.msra.mxu0 %v702
        %787 = vmatpush.msra.mxu0 %v630
        %788 = vmatpush.msra.mxu0 %v688
        %789 = vmatpush.msra.mxu0 %v674
        %790 = vmatpush.msra.mxu0 %v660
        %791 = vmatpush.msra.mxu0 %v646
        %792 = vmatmul.f32.gmra.mxu0 %v754
        %v793 = vpop.f32.mrf.mxu0
        %v794 = vadd.f32 %v750, %v793
        %795 = vdwg.mxu0
        %v796 = vadd.f32 %v774, 3.0
        %v797 = vadd.f32 %v794, 3.0
        %v798 = vmax.f32 %v796, 0.0
        %v799 = vmax.f32 %v797, 0.0
        %v800 = vmin.f32 %v798, 6.0
        %v801 = vmin.f32 %v799, 6.0
        %v802 = vmul.f32 %v774, %v800
        %v803 = vmul.f32 %v794, %v801
        %v804 = vmul.f32 %v802, 0.16666667
        %v805 = vmul.f32 %v803, 0.16666667
        %v806 = vadd.f32 %v569, %v804
        %v807 = vadd.f32 %v570, %v805
        %s808 = scalar_lea.vmem %s4, 8
        %v809 = vld [vmem:[%s808] sm:$0xff]
        %s810 = scalar_lea.vmem %s5, 8
        %v811 = vld [vmem:[%s810] sm:$0xff]
        %813 = vset.pattern.permute.xlu0 0
        %814 = vperm.xlu0 %813, %v811
        %v815 = vpop.permute.xlu0 %814
        %v818 = vsel %vm517, %v809, 0
        %820 = vmatpush.msra.mxu0 0.0
        %821 = vmatpush.msra.mxu0 0.0
        %822 = vmatpush.msra.mxu0 0.0
        %823 = vmatpush.msra.mxu0 0.0
        %824 = vmatpush.msra.mxu0 0.0
        %825 = vmatpush.msra.mxu0 0.0
        %826 = vmatpush.msra.mxu0 0.0
        %827 = vmatpush.msra.mxu0 0.0
        %828 = vmatpush.msra.mxu0 0.0
        %829 = vmatpush.msra.mxu0 0.0
        %830 = vmatpush.msra.mxu0 0.0
        %831 = vmatpush.msra.mxu0 0.0
        %832 = vmatpush.msra.mxu0 0.0
        %833 = vmatpush.msra.mxu0 0.0
        %834 = vmatpush.msra.mxu0 0.0
        %835 = vmatpush.msra.mxu0 %v806
        %836 = vmatmul.f32.gmra.mxu0 %v818
        %v837 = vpop.f32.mrf.mxu0
        %v838 = vadd.f32 %v815, %v837
        %839 = vdwg.mxu0
        %840 = vmatpush.msra.mxu0 0.0
        %841 = vmatpush.msra.mxu0 0.0
        %842 = vmatpush.msra.mxu0 0.0
        %843 = vmatpush.msra.mxu0 0.0
        %844 = vmatpush.msra.mxu0 0.0
        %845 = vmatpush.msra.mxu0 0.0
        %846 = vmatpush.msra.mxu0 0.0
        %847 = vmatpush.msra.mxu0 0.0
        %848 = vmatpush.msra.mxu0 0.0
        %849 = vmatpush.msra.mxu0 0.0
        %850 = vmatpush.msra.mxu0 0.0
        %851 = vmatpush.msra.mxu0 0.0
        %852 = vmatpush.msra.mxu0 0.0
        %853 = vmatpush.msra.mxu0 0.0
        %854 = vmatpush.msra.mxu0 0.0
        %855 = vmatpush.msra.mxu0 %v807
        %856 = vmatmul.f32.gmra.mxu0 %v818
        %v857 = vpop.f32.mrf.mxu0
        %v858 = vadd.f32 %v815, %v857
        %859 = vdwg.mxu0
        %v860 = vadd.f32 %v838, 3.0
        %v861 = vadd.f32 %v858, 3.0
        %v862 = vmax.f32 %v860, 0.0
        %v863 = vmax.f32 %v861, 0.0
        %v864 = vmin.f32 %v862, 6.0
        %v865 = vmin.f32 %v863, 6.0
        %v866 = vmul.f32 %v838, %v864
        %v867 = vmul.f32 %v858, %v865
        %v868 = vmul.f32 %v866, 0.16666667
        %v869 = vmul.f32 %v867, 0.16666667
        %870 = vrot.lane.b32.xlu0 %v868, 17
        %v871 = vpop.permute.xlu0 %870
        %872 = vrot.lane.b32.xlu0 %v869, 17
        %v873 = vpop.permute.xlu0 %872
        %v874 = vsel %vm637, %v871, %v873
        %v875 = vsel %vm637, %v873, %v871
        %v876 = vmul.f32 %v875, %v641
        %v877 = vmul.f32 %v874, %v642
        %878 = vrot.lane.b32.xlu0 %v868, 16
        %v879 = vpop.permute.xlu0 %878
        %880 = vrot.lane.b32.xlu0 %v869, 16
        %v881 = vpop.permute.xlu0 %880
        %v882 = vsel %vm651, %v879, %v881
        %v883 = vsel %vm651, %v881, %v879
        %v884 = vmul.f32 %v883, %v655
        %v885 = vmul.f32 %v882, %v656
        %886 = vrot.lane.b32.xlu0 %v868, 15
        %v887 = vpop.permute.xlu0 %886
        %888 = vrot.lane.b32.xlu0 %v869, 15
        %v889 = vpop.permute.xlu0 %888
        %v890 = vsel %vm665, %v887, %v889
        %v891 = vsel %vm665, %v889, %v887
        %v892 = vmul.f32 %v891, %v669
        %v893 = vmul.f32 %v890, %v670
        %894 = vrot.lane.b32.xlu0 %v868, 1
        %v895 = vpop.permute.xlu0 %894
        %896 = vrot.lane.b32.xlu0 %v869, 1
        %v897 = vpop.permute.xlu0 %896
        %v898 = vsel %vm679, %v895, %v897
        %v899 = vsel %vm679, %v897, %v895
        %v900 = vmul.f32 %v899, %v683
        %v901 = vmul.f32 %v898, %v684
        %902 = vrot.lane.b32.xlu0 %v868, 127
        %v903 = vpop.permute.xlu0 %902
        %904 = vrot.lane.b32.xlu0 %v869, 127
        %v905 = vpop.permute.xlu0 %904
        %v906 = vsel %vm693, %v903, %v905
        %v907 = vsel %vm693, %v905, %v903
        %v908 = vmul.f32 %v906, %v697
        %v909 = vmul.f32 %v907, %v698
        %910 = vrot.lane.b32.xlu0 %v868, 113
        %v911 = vpop.permute.xlu0 %910
        %912 = vrot.lane.b32.xlu0 %v869, 113
        %v913 = vpop.permute.xlu0 %912
        %v914 = vsel %vm707, %v911, %v913
        %v915 = vsel %vm707, %v913, %v911
        %v916 = vmul.f32 %v914, %v711
        %v917 = vmul.f32 %v915, %v712
        %918 = vrot.lane.b32.xlu0 %v868, 112
        %v919 = vpop.permute.xlu0 %918
        %920 = vrot.lane.b32.xlu0 %v869, 112
        %v921 = vpop.permute.xlu0 %920
        %v922 = vsel %vm721, %v919, %v921
        %v923 = vsel %vm721, %v921, %v919
        %v924 = vmul.f32 %v922, %v725
        %v925 = vmul.f32 %v923, %v726
        %926 = vrot.lane.b32.xlu0 %v868, 111
        %v927 = vpop.permute.xlu0 %926
        %928 = vrot.lane.b32.xlu0 %v869, 111
        %v929 = vpop.permute.xlu0 %928
        %v930 = vsel %vm735, %v927, %v929
        %v931 = vsel %vm735, %v929, %v927
        %v932 = vmul.f32 %v930, %v739
        %v933 = vmul.f32 %v931, %v740
        %s934 = scalar_lea.vmem %s6, 8
        %v935 = vld [vmem:[%s934] sm:$0xff]
        %s936 = scalar_lea.vmem %s7, 8
        %v937 = vld [vmem:[%s936] sm:$0xff]
        %939 = vset.pattern.permute.xlu0 0
        %940 = vperm.xlu0 %939, %v937
        %v941 = vpop.permute.xlu0 %940
        %v944 = vsel %vm752, %v935, 0
        %946 = vmatpush.msra.mxu0 0.0
        %947 = vmatpush.msra.mxu0 0.0
        %948 = vmatpush.msra.mxu0 0.0
        %949 = vmatpush.msra.mxu0 0.0
        %950 = vmatpush.msra.mxu0 0.0
        %951 = vmatpush.msra.mxu0 0.0
        %952 = vmatpush.msra.mxu0 0.0
        %953 = vmatpush.msra.mxu0 %v932
        %954 = vmatpush.msra.mxu0 %v924
        %955 = vmatpush.msra.mxu0 %v916
        %956 = vmatpush.msra.mxu0 %v908
        %957 = vmatpush.msra.mxu0 %v868
        %958 = vmatpush.msra.mxu0 %v900
        %959 = vmatpush.msra.mxu0 %v892
        %960 = vmatpush.msra.mxu0 %v884
        %961 = vmatpush.msra.mxu0 %v876
        %962 = vmatmul.f32.gmra.mxu0 %v944
        %v963 = vpop.f32.mrf.mxu0
        %v964 = vadd.f32 %v941, %v963
        %965 = vdwg.mxu0
        %966 = vmatpush.msra.mxu0 0.0
        %967 = vmatpush.msra.mxu0 0.0
        %968 = vmatpush.msra.mxu0 0.0
        %969 = vmatpush.msra.mxu0 0.0
        %970 = vmatpush.msra.mxu0 0.0
        %971 = vmatpush.msra.mxu0 0.0
        %972 = vmatpush.msra.mxu0 0.0
        %973 = vmatpush.msra.mxu0 %v933
        %974 = vmatpush.msra.mxu0 %v925
        %975 = vmatpush.msra.mxu0 %v917
        %976 = vmatpush.msra.mxu0 %v909
        %977 = vmatpush.msra.mxu0 %v869
        %978 = vmatpush.msra.mxu0 %v901
        %979 = vmatpush.msra.mxu0 %v893
        %980 = vmatpush.msra.mxu0 %v885
        %981 = vmatpush.msra.mxu0 %v877
        %982 = vmatmul.f32.gmra.mxu0 %v944
        %v983 = vpop.f32.mrf.mxu0
        %v984 = vadd.f32 %v941, %v983
        %985 = vdwg.mxu0
        %v986 = vadd.f32 %v964, 3.0
        %v987 = vadd.f32 %v984, 3.0
        %v988 = vmax.f32 %v986, 0.0
        %v989 = vmax.f32 %v987, 0.0
        %v990 = vmin.f32 %v988, 6.0
        %v991 = vmin.f32 %v989, 6.0
        %v992 = vmul.f32 %v964, %v990
        %v993 = vmul.f32 %v984, %v991
        %v994 = vmul.f32 %v992, 0.16666667
        %v995 = vmul.f32 %v993, 0.16666667
        %v996 = vadd.f32 %v806, %v994
        %v997 = vadd.f32 %v807, %v995
        %v998 = vld [vmem:[%s8] sm:$0xff]
        %v999 = vld [vmem:[%s10] sm:$0xff]
        %1001 = vset.pattern.permute.xlu0 0
        %1002 = vperm.xlu0 %1001, %v999
        %v1003 = vpop.permute.xlu0 %1002
        %v1006 = vsel %vm517, %v998, 0
        %1008 = vmatpush.msra.mxu0 0.0
        %1009 = vmatpush.msra.mxu0 0.0
        %1010 = vmatpush.msra.mxu0 0.0
        %1011 = vmatpush.msra.mxu0 0.0
        %1012 = vmatpush.msra.mxu0 0.0
        %1013 = vmatpush.msra.mxu0 0.0
        %1014 = vmatpush.msra.mxu0 0.0
        %1015 = vmatpush.msra.mxu0 0.0
        %1016 = vmatpush.msra.mxu0 0.0
        %1017 = vmatpush.msra.mxu0 0.0
        %1018 = vmatpush.msra.mxu0 0.0
        %1019 = vmatpush.msra.mxu0 0.0
        %1020 = vmatpush.msra.mxu0 0.0
        %1021 = vmatpush.msra.mxu0 0.0
        %1022 = vmatpush.msra.mxu0 0.0
        %1023 = vmatpush.msra.mxu0 %v996
        %1024 = vmatmul.f32.gmra.mxu0 %v1006
        %v1025 = vpop.f32.mrf.mxu0
        %v1026 = vadd.f32 %v1003, %v1025
        %1027 = vdwg.mxu0
        %1028 = vmatpush.msra.mxu0 0.0
        %1029 = vmatpush.msra.mxu0 0.0
        %1030 = vmatpush.msra.mxu0 0.0
        %1031 = vmatpush.msra.mxu0 0.0
        %1032 = vmatpush.msra.mxu0 0.0
        %1033 = vmatpush.msra.mxu0 0.0
        %1034 = vmatpush.msra.mxu0 0.0
        %1035 = vmatpush.msra.mxu0 0.0
        %1036 = vmatpush.msra.mxu0 0.0
        %1037 = vmatpush.msra.mxu0 0.0
        %1038 = vmatpush.msra.mxu0 0.0
        %1039 = vmatpush.msra.mxu0 0.0
        %1040 = vmatpush.msra.mxu0 0.0
        %1041 = vmatpush.msra.mxu0 0.0
        %1042 = vmatpush.msra.mxu0 0.0
        %1043 = vmatpush.msra.mxu0 %v997
        %1044 = vmatmul.f32.gmra.mxu0 %v1006
        %v1045 = vpop.f32.mrf.mxu0
        %v1046 = vadd.f32 %v1003, %v1045
        %1047 = vdwg.mxu0
        %v1048 = vmul.f32 %v1026, 0.1
        %v1049 = vmul.f32 %v1046, 0.1
        %v1050 = vmax.f32 %v1026, %v1048
        %v1051 = vmax.f32 %v1046, %v1049
        %v1052 = vld [vmem:[%s9] sm:$0xff]
        %v1053 = vld [vmem:[%s11] sm:$0xff]
        %1055 = vset.pattern.permute.xlu0 0
        %1056 = vperm.xlu0 %1055, %v1053
        %v1057 = vpop.permute.xlu0 %1056
        %v1060 = vsel %vm517, %v1052, 0
        %1062 = vmatpush.msra.mxu0 0.0
        %1063 = vmatpush.msra.mxu0 0.0
        %1064 = vmatpush.msra.mxu0 0.0
        %1065 = vmatpush.msra.mxu0 0.0
        %1066 = vmatpush.msra.mxu0 0.0
        %1067 = vmatpush.msra.mxu0 0.0
        %1068 = vmatpush.msra.mxu0 0.0
        %1069 = vmatpush.msra.mxu0 0.0
        %1070 = vmatpush.msra.mxu0 0.0
        %1071 = vmatpush.msra.mxu0 0.0
        %1072 = vmatpush.msra.mxu0 0.0
        %1073 = vmatpush.msra.mxu0 0.0
        %1074 = vmatpush.msra.mxu0 0.0
        %1075 = vmatpush.msra.mxu0 0.0
        %1076 = vmatpush.msra.mxu0 0.0
        %1077 = vmatpush.msra.mxu0 %v493
        %1078 = vmatmul.f32.gmra.mxu0 %v1060
        %v1079 = vpop.f32.mrf.mxu0
        %v1080 = vadd.f32 %v1057, %v1079
        %1081 = vdwg.mxu0
        %1082 = vmatpush.msra.mxu0 0.0
        %1083 = vmatpush.msra.mxu0 0.0
        %1084 = vmatpush.msra.mxu0 0.0
        %1085 = vmatpush.msra.mxu0 0.0
        %1086 = vmatpush.msra.mxu0 0.0
        %1087 = vmatpush.msra.mxu0 0.0
        %1088 = vmatpush.msra.mxu0 0.0
        %1089 = vmatpush.msra.mxu0 0.0
        %1090 = vmatpush.msra.mxu0 0.0
        %1091 = vmatpush.msra.mxu0 0.0
        %1092 = vmatpush.msra.mxu0 0.0
        %1093 = vmatpush.msra.mxu0 0.0
        %1094 = vmatpush.msra.mxu0 0.0
        %1095 = vmatpush.msra.mxu0 0.0
        %1096 = vmatpush.msra.mxu0 0.0
        %1097 = vmatpush.msra.mxu0 %v494
        %1098 = vmatmul.f32.gmra.mxu0 %v1060
        %v1099 = vpop.f32.mrf.mxu0
        %v1100 = vadd.f32 %v1057, %v1099
        %1101 = vdwg.mxu0
        %v1102 = vmul.f32 %v1080, 0.1
        %v1103 = vmul.f32 %v1100, 0.1
        %v1104 = vmax.f32 %v1080, %v1102
        %v1105 = vmax.f32 %v1100, %v1103
        %v1106 = vld [vmem:[%s12] sm:$0xff]
        %v1107 = vld [vmem:[%s12 + $0x8] sm:$0xff]
        %v1108 = vld [vmem:[%s13] sm:$0xff]
        %v1109 = vld [vmem:[%s13 + $0x8] sm:$0xff]
        %v1111 = vsel %vm517, %v1108, 0
        %v1114 = vsel %vm517, %v1109, 0
        %1116 = vmatpush.msra.mxu0 0.0
        %1117 = vmatpush.msra.mxu0 0.0
        %1118 = vmatpush.msra.mxu0 0.0
        %1119 = vmatpush.msra.mxu0 0.0
        %1120 = vmatpush.msra.mxu0 0.0
        %1121 = vmatpush.msra.mxu0 0.0
        %1122 = vmatpush.msra.mxu0 0.0
        %1123 = vmatpush.msra.mxu0 0.0
        %1124 = vmatpush.msra.mxu0 0.0
        %1125 = vmatpush.msra.mxu0 0.0
        %1126 = vmatpush.msra.mxu0 0.0
        %1127 = vmatpush.msra.mxu0 0.0
        %1128 = vmatpush.msra.mxu0 0.0
        %1129 = vmatpush.msra.mxu0 0.0
        %1130 = vmatpush.msra.mxu0 0.0
        %1131 = vmatpush.msra.mxu0 %v1104
        %1132 = vmatmul.f32.gmra.mxu0 %v1111
        %v1133 = vpop.f32.mrf.mxu0
        %v1134 = vadd.f32 0.0, %v1133
        %1135 = vmatmul.f32.gmra.mxu0 %v1114
        %v1136 = vpop.f32.mrf.mxu0
        %v1137 = vadd.f32 0.0, %v1136
        %1138 = vdwg.mxu0
        %1139 = vmatpush.msra.mxu0 0.0
        %1140 = vmatpush.msra.mxu0 0.0
        %1141 = vmatpush.msra.mxu0 0.0
        %1142 = vmatpush.msra.mxu0 0.0
        %1143 = vmatpush.msra.mxu0 0.0
        %1144 = vmatpush.msra.mxu0 0.0
        %1145 = vmatpush.msra.mxu0 0.0
        %1146 = vmatpush.msra.mxu0 0.0
        %1147 = vmatpush.msra.mxu0 0.0
        %1148 = vmatpush.msra.mxu0 0.0
        %1149 = vmatpush.msra.mxu0 0.0
        %1150 = vmatpush.msra.mxu0 0.0
        %1151 = vmatpush.msra.mxu0 0.0
        %1152 = vmatpush.msra.mxu0 0.0
        %1153 = vmatpush.msra.mxu0 0.0
        %1154 = vmatpush.msra.mxu0 %v1105
        %1155 = vmatmul.f32.gmra.mxu0 %v1111
        %v1156 = vpop.f32.mrf.mxu0
        %v1157 = vadd.f32 0.0, %v1156
        %1158 = vmatmul.f32.gmra.mxu0 %v1114
        %v1159 = vpop.f32.mrf.mxu0
        %v1160 = vadd.f32 0.0, %v1159
        %1161 = vdwg.mxu0
        %v1163 = vsel %vm517, %v1106, 0
        %v1166 = vsel %vm517, %v1107, 0
        %1168 = vmatpush.msra.mxu0 0.0
        %1169 = vmatpush.msra.mxu0 0.0
        %1170 = vmatpush.msra.mxu0 0.0
        %1171 = vmatpush.msra.mxu0 0.0
        %1172 = vmatpush.msra.mxu0 0.0
        %1173 = vmatpush.msra.mxu0 0.0
        %1174 = vmatpush.msra.mxu0 0.0
        %1175 = vmatpush.msra.mxu0 0.0
        %1176 = vmatpush.msra.mxu0 0.0
        %1177 = vmatpush.msra.mxu0 0.0
        %1178 = vmatpush.msra.mxu0 0.0
        %1179 = vmatpush.msra.mxu0 0.0
        %1180 = vmatpush.msra.mxu0 0.0
        %1181 = vmatpush.msra.mxu0 0.0
        %1182 = vmatpush.msra.mxu0 0.0
        %1183 = vmatpush.msra.mxu0 %v1050
        %1184 = vmatmul.f32.gmra.mxu0 %v1163
        %v1185 = vpop.f32.mrf.mxu0
        %v1186 = vadd.f32 %v1134, %v1185
        %1187 = vmatmul.f32.gmra.mxu0 %v1166
        %v1188 = vpop.f32.mrf.mxu0
        %v1189 = vadd.f32 %v1137, %v1188
        %1190 = vdwg.mxu0
        %1191 = vmatpush.msra.mxu0 0.0
        %1192 = vmatpush.msra.mxu0 0.0
        %1193 = vmatpush.msra.mxu0 0.0
        %1194 = vmatpush.msra.mxu0 0.0
        %1195 = vmatpush.msra.mxu0 0.0
        %1196 = vmatpush.msra.mxu0 0.0
        %1197 = vmatpush.msra.mxu0 0.0
        %1198 = vmatpush.msra.mxu0 0.0
        %1199 = vmatpush.msra.mxu0 0.0
        %1200 = vmatpush.msra.mxu0 0.0
        %1201 = vmatpush.msra.mxu0 0.0
        %1202 = vmatpush.msra.mxu0 0.0
        %1203 = vmatpush.msra.mxu0 0.0
        %1204 = vmatpush.msra.mxu0 0.0
        %1205 = vmatpush.msra.mxu0 0.0
        %1206 = vmatpush.msra.mxu0 %v1051
        %1207 = vmatmul.f32.gmra.mxu0 %v1163
        %v1208 = vpop.f32.mrf.mxu0
        %v1209 = vadd.f32 %v1157, %v1208
        %1210 = vmatmul.f32.gmra.mxu0 %v1166
        %v1211 = vpop.f32.mrf.mxu0
        %v1212 = vadd.f32 %v1160, %v1211
        %1213 = vdwg.mxu0
        %v1214 = vld [vmem:[%s14] sm:$0xff]
        %v1215 = vld [vmem:[%s14 + $0x8] sm:$0xff]
        %1217 = vset.pattern.permute.xlu0 0
        %1218 = vperm.xlu0 %1217, %v1214
        %v1219 = vpop.permute.xlu0 %1218
        %1222 = vset.pattern.permute.xlu0 0
        %1223 = vperm.xlu0 %1222, %v1215
        %v1224 = vpop.permute.xlu0 %1223
        %v1226 = vadd.f32 %v1186, %v1219
        %v1227 = vadd.f32 %v1209, %v1219
        %v1228 = vadd.f32 %v1189, %v1224
        %v1229 = vadd.f32 %v1212, %v1224
        %v1230 = vadd.f32 %v1226, 3.0
        %v1231 = vadd.f32 %v1227, 3.0
        %v1232 = vadd.f32 %v1228, 3.0
        %v1233 = vadd.f32 %v1229, 3.0
        %v1234 = vmax.f32 %v1230, 0.0
        %v1235 = vmax.f32 %v1231, 0.0
        %v1236 = vmax.f32 %v1232, 0.0
        %v1237 = vmax.f32 %v1233, 0.0
        %v1238 = vmin.f32 %v1234, 6.0
        %v1239 = vmin.f32 %v1235, 6.0
        %v1240 = vmin.f32 %v1236, 6.0
        %v1241 = vmin.f32 %v1237, 6.0
        %v1242 = vmul.f32 %v1226, %v1238
        %v1243 = vmul.f32 %v1227, %v1239
        %v1244 = vmul.f32 %v1228, %v1240
        %v1245 = vmul.f32 %v1229, %v1241
        %v1246 = vmul.f32 %v1242, 0.16666667
        %v1247 = vmul.f32 %v1243, 0.16666667
        %v1248 = vmul.f32 %v1244, 0.16666667
        %v1249 = vmul.f32 %v1245, 0.16666667
        %1250 = vst [vmem:[%s487] sm:$0xff] %v1246
        %1251 = vst [vmem:[%s487 + $0x8] sm:$0xff] %v1247
        %1252 = vst [vmem:[%s487 + $0x10] sm:$0xff] %v1248
        %1253 = vst [vmem:[%s487 + $0x18] sm:$0xff] %v1249
        %s1254 = sand.u32 %s357, 1
        %s1255 = scalar_lea.sflag [#allocation3], %s1254
        %s1256 = sand.u32 %s357, 1
        %s1257 = smul.addr %s1256, 32
        %s1258 = scalar_lea.vmem [#allocation2], %s1257
        // Predicated region
        $region81: #{tpu_custom_call.1} parent=79 // pred_check
          %p1259 = pneg %p367
        $region82: #{tpu_custom_call.1} parent=79 // pred_check_branch
          %1261 = sbr.rel (%p1259) target = $region84
        $region83: #{tpu_custom_call.1} parent=79 // pred_region
          %1263 = vsyncadd %s1255, 0
          %s1264 = smul.addr %s29, 4
          %s1265 = smul.addr %s1264, 8
          %s1266 = scalar_lea.hbm %s15, %s1265
          %s1267 = sshll.u32 %s1258, 4
          %s1268 = int_to_ptr.vmem [resolvable:$true] %s1267
          %s1269 = sshll.u32 %s1266, 4
          %s1270 = int_to_ptr.hbm [resolvable:$true] %s1269
          %1275 = dma.vmem_to_hbm [thread:$0]  %s1268, 512, %s1270, %s1255, 256, 256, 16
        $region84: #{tpu_custom_call.1} parent=79 // pred_fallthru
          _
      $region80: #{tpu_custom_call.1} parent=5 // pred_fallthru
        _
      %p1276 = scmp.le.s32.totalorder 2, %s24
      // Predicated region
      $region85: #{tpu_custom_call.1} parent=5 // pred_check
        %p1277 = pneg %p1276
      $region86: #{tpu_custom_call.1} parent=5 // pred_check_branch
        %1279 = sbr.rel (%p1277) target = $region88
      $region87: #{tpu_custom_call.1} parent=5 // pred_region
        %s1280 = ssub.s32 %s24, 2
        // Predicated region
        $region89: #{tpu_custom_call.1} parent=87 // pred_check
          %p1281 = pneg %p373
        $region90: #{tpu_custom_call.1} parent=87 // pred_check_branch
          %1283 = sbr.rel (%p1281) target = $region92
        $region91: #{tpu_custom_call.1} parent=87 // pred_region
          %s1284 = sand.u32 %s358, 1
          %s1285 = scalar_lea.sflag [#allocation3], %s1284
          %s1286 = sand.u32 %s358, 1
          %s1287 = smul.addr %s1286, 32
          %s1288 = scalar_lea.vmem [#allocation2], %s1287
          %1290 = dma.done %s1285, 512
        $region92: #{tpu_custom_call.1} parent=87 // pred_fallthru
          _
      $region88: #{tpu_custom_call.1} parent=5 // pred_fallthru
        _
    $region6: #{tpu_custom_call.1} parent=1 // loop_footer
      %s28 = sadd.s32 1, %s24
    $region7: #{tpu_custom_call.1} parent=1 // loop_footer_branch
      %23 = sbr.rel target = $region3
    $region8: #{tpu_custom_call.1} parent=1 // loop_exit
      _
    %1291 = vsyncpa [#allocation3], 1
    %s1292 = scalar_lea.sflag [#allocation3], 1
    %1293 = vsyncpa %s1292, 1

</llo_original>
